<compile_context>
chip_gen: v7x
topology: tpu7x:2x2x1
jax: 0.10.0
libtpu: 0.0.40
codegen_flags: <defaults>
</compile_context>

<pallas_src>
import jax
import jax.numpy as jnp
from jax import lax
from jax.experimental import pallas as pl
from jax.experimental.pallas import tpu as pltpu

INPUT_SIZE = 6
HIDDEN = 50
HP = 128          # per-gate lane padding (vreg lane width)
FP = 8            # padded feature dim (sublane multiple)


def lstm_kernel(x_ref, w_ih_ref, w_hh_ref, b_ref, w_lin_ref, b_lin_ref, o_ref):
    # x_ref:     (T*Bp, Fp)   time-major, batch-padded, flattened input
    # w_ih_ref:  (Fp, 4*HP)   input->gates, gate order [i, f, o, g], zero padded
    # w_hh_ref:  (HP, 4*HP)   hidden->gates, same order/padding
    # b_ref:     (1, 4*HP)    b_ih + b_hh, same order/padding
    # w_lin_ref: (1, HP)      final linear weight row, zero padded past H
    # b_lin_ref: (1, 1)       final linear bias
    # o_ref:     (Bp, T)      output slab (padded batch rows sliced off outside)
    Bp, T = o_ref.shape
    G = w_hh_ref.shape[1]          # 4*HP
    Hp = G // 4

    w_hh = w_hh_ref[...]
    # Hoisted broadcast: JAX does not CSE broadcast_in_dim inside the unrolled
    # loop, so materialize the (Bp, HP) linear-weight tile exactly once.
    w_lin_b = jnp.broadcast_to(w_lin_ref[...], (Bp, Hp))

    # Hoisted input projection + bias: one (T*Bp, Fp) @ (Fp, 4*HP) matmul
    # instead of T tiny matmuls on the serial critical path.
    xg = (jnp.dot(x_ref[...], w_ih_ref[...],
                  preferred_element_type=jnp.float32)
          + b_ref[...])            # (T*Bp, 4*HP)

    h = jnp.zeros((Bp, Hp), jnp.float32)
    c = jnp.zeros((Bp, Hp), jnp.float32)
    ys = []
    # Fully unrolled recurrence (T is small and static) — gives the LLO
    # scheduler cross-iteration visibility; only h @ W_hh + gate math is
    # actually serial, the per-step output reduce overlaps the next matmul.
    for t in range(T):
        gates = xg[t * Bp:(t + 1) * Bp, :] + jnp.dot(
            h, w_hh, preferred_element_type=jnp.float32)        # (Bp, 4*HP)
        # Gate order [i, f, o, g]: one sigmoid over the first 3 blocks,
        # one tanh over the last. All slice boundaries are 128-lane aligned.
        sig = jax.nn.sigmoid(gates[:, 0:3 * Hp])
        g_g = jnp.tanh(gates[:, 3 * Hp:4 * Hp])
        i_g = sig[:, 0:Hp]
        f_g = sig[:, Hp:2 * Hp]
        o_g = sig[:, 2 * Hp:3 * Hp]
        c = f_g * c + i_g * g_g
        h = o_g * jnp.tanh(c)
        # Fused final Linear (off the serial path): VPU multiply + lane reduce.
        ys.append(jnp.sum(h * w_lin_b, axis=-1, keepdims=True))  # (Bp, 1)

    # Single lane-concat, single bias add, single store of the (Bp, T) slab.
    o_ref[...] = jnp.concatenate(ys, axis=1) + b_lin_ref[...]


def _reorder_pad_rows(w):
    """(4H, X) PyTorch gate rows [i,f,g,o] -> (4*HP, X) rows [i,f,o,g], zero pad."""
    H = HIDDEN
    i_, f_, g_, o_ = w[0:H], w[H:2 * H], w[2 * H:3 * H], w[3 * H:4 * H]
    pad = lambda blk: jnp.pad(blk, ((0, HP - H), (0, 0)))
    return jnp.concatenate([pad(i_), pad(f_), pad(o_), pad(g_)], axis=0)


def _reorder_pad_vec(b):
    """(4H,) gate bias [i,f,g,o] -> (4*HP,) [i,f,o,g], zero pad."""
    H = HIDDEN
    i_, f_, g_, o_ = b[0:H], b[H:2 * H], b[2 * H:3 * H], b[3 * H:4 * H]
    pad = lambda blk: jnp.pad(blk, (0, HP - H))
    return jnp.concatenate([pad(i_), pad(f_), pad(o_), pad(g_)])


def lstm_model_forward(x, params):
    """x: (B, T, F) batch-first like the PyTorch module. Returns (B, T)."""
    w_ih, w_hh, b_ih, b_hh, w_lin, b_lin = params
    B, T, F = x.shape
    assert F == INPUT_SIZE

    # Layout plumbing in the wrapper (not compute): time-major, pad batch to
    # 8 sublanes, pad features, flatten to a single lane-friendly matmul slab.
    Bp = max(8, ((B + 7) // 8) * 8)
    x_tbf = jnp.transpose(x, (1, 0, 2)).astype(jnp.float32)       # (T, B, F)
    x_pad = jnp.pad(x_tbf, ((0, 0), (0, Bp - B), (0, FP - F)))    # (T, Bp, Fp)
    x_flat = x_pad.reshape(T * Bp, FP)

    # Gate-padded, reordered weights (padding columns/rows zero-filled so
    # padded lanes of h/c stay exactly zero through the recurrence).
    # TODO(synk): on v6e/v7x the matmul operands could be bf16 (f32 accum) for
    # a shorter h@W_hh latency; kept f32 for strict reference parity.
    w_ih_p = jnp.pad(_reorder_pad_rows(w_ih), ((0, 0), (0, FP - F))).T        # (Fp, 4*HP)
    w_hh_p = jnp.pad(_reorder_pad_rows(w_hh), ((0, 0), (0, HP - HIDDEN))).T   # (HP, 4*HP)
    b_p = _reorder_pad_vec(b_ih + b_hh).reshape(1, 4 * HP)                    # (1, 4*HP)
    w_lin_p = jnp.pad(w_lin, ((0, 0), (0, HP - HIDDEN)))                      # (1, HP)
    b_lin2 = b_lin.reshape(1, 1)                                              # (1, 1)

    vmem = pl.BlockSpec(memory_space=pltpu.MemorySpace.VMEM)
    out_bt = pl.pallas_call(
        lstm_kernel,
        out_shape=jax.ShapeDtypeStruct((Bp, T), jnp.float32),
        in_specs=[vmem] * 6,
        out_specs=vmem,
    )(x_flat, w_ih_p, w_hh_p, b_p, w_lin_p, b_lin2)

    return out_bt[:B]                                             # (B, T)


def lstm_model_reference(x, params):
    """Pure-JAX reference matching PyTorch nn.LSTM + Linear semantics."""
    w_ih, w_hh, b_ih, b_hh, w_lin, b_lin = params
    B, T, _ = x.shape
    H = HIDDEN

    def step(carry, x_t):
        h, c = carry
        gates = x_t @ w_ih.T + h @ w_hh.T + b_ih + b_hh
        i_g = jax.nn.sigmoid(gates[:, 0:H])
        f_g = jax.nn.sigmoid(gates[:, H:2 * H])
        g_g = jnp.tanh(gates[:, 2 * H:3 * H])
        o_g = jax.nn.sigmoid(gates[:, 3 * H:4 * H])
        c_new = f_g * c + i_g * g_g
        h_new = o_g * jnp.tanh(c_new)
        return (h_new, c_new), h_new

    h0 = jnp.zeros((B, H), jnp.float32)
    c0 = jnp.zeros((B, H), jnp.float32)
    _, hs = lax.scan(step, (h0, c0), jnp.transpose(x, (1, 0, 2)))  # (T, B, H)
    y = hs @ w_lin.T + b_lin                                        # (T, B, 1)
    return jnp.transpose(y[..., 0], (1, 0))                         # (B, T)


def init_params(key):
    """Deterministic init matching PyTorch default U(-1/sqrt(H), 1/sqrt(H))."""
    k = 1.0 / jnp.sqrt(jnp.float32(HIDDEN))
    keys = jax.random.split(key, 6)
    w_ih = jax.random.uniform(keys[0], (4 * HIDDEN, INPUT_SIZE), jnp.float32, -k, k)
    w_hh = jax.random.uniform(keys[1], (4 * HIDDEN, HIDDEN), jnp.float32, -k, k)
    b_ih = jax.random.uniform(keys[2], (4 * HIDDEN,), jnp.float32, -k, k)
    b_hh = jax.random.uniform(keys[3], (4 * HIDDEN,), jnp.float32, -k, k)
    w_lin = jax.random.uniform(keys[4], (1, HIDDEN), jnp.float32, -k, k)
    b_lin = jax.random.uniform(keys[5], (1,), jnp.float32, -k, k)
    return (w_ih, w_hh, b_ih, b_hh, w_lin, b_lin)


if __name__ == "__main__":
    key = jax.random.PRNGKey(0)
    pkey, xkey = jax.random.split(key)

    B, T = 2, 8                                  # small shapes; F=6 fixed by module
    params = init_params(pkey)
    x = jax.random.normal(xkey, (B, T, INPUT_SIZE), jnp.float32)

    out = lstm_model_forward(x, params)
    out = jax.block_until_ready(out)

    ref = jax.block_until_ready(lstm_model_reference(x, params))
    assert out.shape == (B, T), out.shape
    assert jnp.allclose(out, ref, rtol=1e-3, atol=1e-3), (
        f"max abs err {jnp.max(jnp.abs(out - ref))}")

    print("KERNEL_OK")
</pallas_src>

<mosaic_0001>
module attributes {stable_mosaic.version = 11 : i64} {
  func.func @lstm_kernel(%arg0: memref<64x8xf32, #tpu.memory_space<vmem>>, %arg1: memref<8x512xf32, #tpu.memory_space<vmem>>, %arg2: memref<128x512xf32, #tpu.memory_space<vmem>>, %arg3: memref<1x512xf32, #tpu.memory_space<vmem>>, %arg4: memref<1x128xf32, #tpu.memory_space<vmem>>, %arg5: memref<1x1xf32, #tpu.memory_space<vmem>>, %arg6: memref<8x8xf32, #tpu.memory_space<vmem>>) attributes {dimension_semantics = [], scalar_prefetch = 0 : i64, scratch_operands = 0 : i64, tpu.core_type = #tpu.core_type<tc>} {
    %c0 = arith.constant 0 : index
    %c0_0 = arith.constant 0 : index
    %0 = vector.load %arg2[%c0, %c0_0] : memref<128x512xf32, #tpu.memory_space<vmem>>, vector<128x512xf32>
    %c0_1 = arith.constant 0 : index
    %c0_2 = arith.constant 0 : index
    %1 = vector.load %arg4[%c0_1, %c0_2] : memref<1x128xf32, #tpu.memory_space<vmem>>, vector<1x128xf32>
    %2 = vector.shape_cast %1 : vector<1x128xf32> to vector<1x128xf32>
    %3 = vector.broadcast %2 : vector<1x128xf32> to vector<8x128xf32>
    %c0_3 = arith.constant 0 : index
    %c0_4 = arith.constant 0 : index
    %4 = vector.load %arg0[%c0_3, %c0_4] : memref<64x8xf32, #tpu.memory_space<vmem>>, vector<64x8xf32>
    %c0_5 = arith.constant 0 : index
    %c0_6 = arith.constant 0 : index
    %5 = vector.load %arg1[%c0_5, %c0_6] : memref<8x512xf32, #tpu.memory_space<vmem>>, vector<8x512xf32>
    %cst = arith.constant dense<0.000000e+00> : vector<64x512xf32>
    %6 = tpu.matmul %4, %5, %cst {dimension_numbers = #tpu.dot_dimension_numbers<[1], [0], [0], [1], [0, 0, 1, 1], [], []>} : vector<64x8xf32>, vector<8x512xf32>, vector<64x512xf32> -> vector<64x512xf32>
    %c0_7 = arith.constant 0 : index
    %c0_8 = arith.constant 0 : index
    %7 = vector.load %arg3[%c0_7, %c0_8] : memref<1x512xf32, #tpu.memory_space<vmem>>, vector<1x512xf32>
    %8 = vector.broadcast %7 : vector<1x512xf32> to vector<64x512xf32>
    %9 = arith.addf %6, %8 : vector<64x512xf32>
    %cst_9 = arith.constant 0.000000e+00 : f32
    %10 = vector.broadcast %cst_9 : f32 to vector<8x128xf32>
    %cst_10 = arith.constant 0.000000e+00 : f32
    %11 = vector.broadcast %cst_10 : f32 to vector<8x128xf32>
    %12 = vector.extract_strided_slice %9 {offsets = [0, 0], sizes = [8, 512], strides = [1, 1]} : vector<64x512xf32> to vector<8x512xf32>
    %cst_11 = arith.constant dense<0.000000e+00> : vector<8x512xf32>
    %13 = tpu.matmul %10, %0, %cst_11 {dimension_numbers = #tpu.dot_dimension_numbers<[1], [0], [0], [1], [0, 0, 1, 1], [], []>} : vector<8x128xf32>, vector<128x512xf32>, vector<8x512xf32> -> vector<8x512xf32>
    %14 = arith.addf %12, %13 : vector<8x512xf32>
    %15 = vector.extract_strided_slice %14 {offsets = [0, 0], sizes = [8, 384], strides = [1, 1]} : vector<8x512xf32> to vector<8x384xf32>
    %16 = arith.negf %15 : vector<8x384xf32>
    %17 = math.exp %16 : vector<8x384xf32>
    %cst_12 = arith.constant 1.000000e+00 : f32
    %18 = vector.broadcast %cst_12 : f32 to vector<8x384xf32>
    %19 = arith.addf %18, %17 : vector<8x384xf32>
    %20 = arith.divf %18, %19 : vector<8x384xf32>
    %21 = vector.extract_strided_slice %14 {offsets = [0, 384], sizes = [8, 128], strides = [1, 1]} : vector<8x512xf32> to vector<8x128xf32>
    %22 = math.tanh %21 : vector<8x128xf32>
    %23 = vector.extract_strided_slice %20 {offsets = [0, 0], sizes = [8, 128], strides = [1, 1]} : vector<8x384xf32> to vector<8x128xf32>
    %24 = vector.extract_strided_slice %20 {offsets = [0, 128], sizes = [8, 128], strides = [1, 1]} : vector<8x384xf32> to vector<8x128xf32>
    %25 = vector.extract_strided_slice %20 {offsets = [0, 256], sizes = [8, 128], strides = [1, 1]} : vector<8x384xf32> to vector<8x128xf32>
    %26 = arith.mulf %24, %11 : vector<8x128xf32>
    %27 = arith.mulf %23, %22 : vector<8x128xf32>
    %28 = arith.addf %26, %27 : vector<8x128xf32>
    %29 = math.tanh %28 : vector<8x128xf32>
    %30 = arith.mulf %25, %29 : vector<8x128xf32>
    %31 = arith.mulf %30, %3 : vector<8x128xf32>
    %cst_13 = arith.constant dense<0.000000e+00> : vector<8xf32>
    %32 = vector.multi_reduction <add>, %31, %cst_13 [1] : vector<8x128xf32> to vector<8xf32>
    %33 = vector.shape_cast %32 : vector<8xf32> to vector<8x1xf32>
    %34 = vector.extract_strided_slice %9 {offsets = [8, 0], sizes = [8, 512], strides = [1, 1]} : vector<64x512xf32> to vector<8x512xf32>
    %cst_14 = arith.constant dense<0.000000e+00> : vector<8x512xf32>
    %35 = tpu.matmul %30, %0, %cst_14 {dimension_numbers = #tpu.dot_dimension_numbers<[1], [0], [0], [1], [0, 0, 1, 1], [], []>} : vector<8x128xf32>, vector<128x512xf32>, vector<8x512xf32> -> vector<8x512xf32>
    %36 = arith.addf %34, %35 : vector<8x512xf32>
    %37 = vector.extract_strided_slice %36 {offsets = [0, 0], sizes = [8, 384], strides = [1, 1]} : vector<8x512xf32> to vector<8x384xf32>
    %38 = arith.negf %37 : vector<8x384xf32>
    %39 = math.exp %38 : vector<8x384xf32>
    %cst_15 = arith.constant 1.000000e+00 : f32
    %40 = vector.broadcast %cst_15 : f32 to vector<8x384xf32>
    %41 = arith.addf %40, %39 : vector<8x384xf32>
    %42 = arith.divf %40, %41 : vector<8x384xf32>
    %43 = vector.extract_strided_slice %36 {offsets = [0, 384], sizes = [8, 128], strides = [1, 1]} : vector<8x512xf32> to vector<8x128xf32>
    %44 = math.tanh %43 : vector<8x128xf32>
    %45 = vector.extract_strided_slice %42 {offsets = [0, 0], sizes = [8, 128], strides = [1, 1]} : vector<8x384xf32> to vector<8x128xf32>
    %46 = vector.extract_strided_slice %42 {offsets = [0, 128], sizes = [8, 128], strides = [1, 1]} : vector<8x384xf32> to vector<8x128xf32>
    %47 = vector.extract_strided_slice %42 {offsets = [0, 256], sizes = [8, 128], strides = [1, 1]} : vector<8x384xf32> to vector<8x128xf32>
    %48 = arith.mulf %46, %28 : vector<8x128xf32>
    %49 = arith.mulf %45, %44 : vector<8x128xf32>
    %50 = arith.addf %48, %49 : vector<8x128xf32>
    %51 = math.tanh %50 : vector<8x128xf32>
    %52 = arith.mulf %47, %51 : vector<8x128xf32>
    %53 = arith.mulf %52, %3 : vector<8x128xf32>
    %cst_16 = arith.constant dense<0.000000e+00> : vector<8xf32>
    %54 = vector.multi_reduction <add>, %53, %cst_16 [1] : vector<8x128xf32> to vector<8xf32>
    %55 = vector.shape_cast %54 : vector<8xf32> to vector<8x1xf32>
    %56 = vector.extract_strided_slice %9 {offsets = [16, 0], sizes = [8, 512], strides = [1, 1]} : vector<64x512xf32> to vector<8x512xf32>
    %cst_17 = arith.constant dense<0.000000e+00> : vector<8x512xf32>
    %57 = tpu.matmul %52, %0, %cst_17 {dimension_numbers = #tpu.dot_dimension_numbers<[1], [0], [0], [1], [0, 0, 1, 1], [], []>} : vector<8x128xf32>, vector<128x512xf32>, vector<8x512xf32> -> vector<8x512xf32>
    %58 = arith.addf %56, %57 : vector<8x512xf32>
    %59 = vector.extract_strided_slice %58 {offsets = [0, 0], sizes = [8, 384], strides = [1, 1]} : vector<8x512xf32> to vector<8x384xf32>
    %60 = arith.negf %59 : vector<8x384xf32>
    %61 = math.exp %60 : vector<8x384xf32>
    %cst_18 = arith.constant 1.000000e+00 : f32
    %62 = vector.broadcast %cst_18 : f32 to vector<8x384xf32>
    %63 = arith.addf %62, %61 : vector<8x384xf32>
    %64 = arith.divf %62, %63 : vector<8x384xf32>
    %65 = vector.extract_strided_slice %58 {offsets = [0, 384], sizes = [8, 128], strides = [1, 1]} : vector<8x512xf32> to vector<8x128xf32>
    %66 = math.tanh %65 : vector<8x128xf32>
    %67 = vector.extract_strided_slice %64 {offsets = [0, 0], sizes = [8, 128], strides = [1, 1]} : vector<8x384xf32> to vector<8x128xf32>
    %68 = vector.extract_strided_slice %64 {offsets = [0, 128], sizes = [8, 128], strides = [1, 1]} : vector<8x384xf32> to vector<8x128xf32>
    %69 = vector.extract_strided_slice %64 {offsets = [0, 256], sizes = [8, 128], strides = [1, 1]} : vector<8x384xf32> to vector<8x128xf32>
    %70 = arith.mulf %68, %50 : vector<8x128xf32>
    %71 = arith.mulf %67, %66 : vector<8x128xf32>
    %72 = arith.addf %70, %71 : vector<8x128xf32>
    %73 = math.tanh %72 : vector<8x128xf32>
    %74 = arith.mulf %69, %73 : vector<8x128xf32>
    %75 = arith.mulf %74, %3 : vector<8x128xf32>
    %cst_19 = arith.constant dense<0.000000e+00> : vector<8xf32>
    %76 = vector.multi_reduction <add>, %75, %cst_19 [1] : vector<8x128xf32> to vector<8xf32>
    %77 = vector.shape_cast %76 : vector<8xf32> to vector<8x1xf32>
    %78 = vector.extract_strided_slice %9 {offsets = [24, 0], sizes = [8, 512], strides = [1, 1]} : vector<64x512xf32> to vector<8x512xf32>
    %cst_20 = arith.constant dense<0.000000e+00> : vector<8x512xf32>
    %79 = tpu.matmul %74, %0, %cst_20 {dimension_numbers = #tpu.dot_dimension_numbers<[1], [0], [0], [1], [0, 0, 1, 1], [], []>} : vector<8x128xf32>, vector<128x512xf32>, vector<8x512xf32> -> vector<8x512xf32>
    %80 = arith.addf %78, %79 : vector<8x512xf32>
    %81 = vector.extract_strided_slice %80 {offsets = [0, 0], sizes = [8, 384], strides = [1, 1]} : vector<8x512xf32> to vector<8x384xf32>
    %82 = arith.negf %81 : vector<8x384xf32>
    %83 = math.exp %82 : vector<8x384xf32>
    %cst_21 = arith.constant 1.000000e+00 : f32
    %84 = vector.broadcast %cst_21 : f32 to vector<8x384xf32>
    %85 = arith.addf %84, %83 : vector<8x384xf32>
    %86 = arith.divf %84, %85 : vector<8x384xf32>
    %87 = vector.extract_strided_slice %80 {offsets = [0, 384], sizes = [8, 128], strides = [1, 1]} : vector<8x512xf32> to vector<8x128xf32>
    %88 = math.tanh %87 : vector<8x128xf32>
    %89 = vector.extract_strided_slice %86 {offsets = [0, 0], sizes = [8, 128], strides = [1, 1]} : vector<8x384xf32> to vector<8x128xf32>
    %90 = vector.extract_strided_slice %86 {offsets = [0, 128], sizes = [8, 128], strides = [1, 1]} : vector<8x384xf32> to vector<8x128xf32>
    %91 = vector.extract_strided_slice %86 {offsets = [0, 256], sizes = [8, 128], strides = [1, 1]} : vector<8x384xf32> to vector<8x128xf32>
    %92 = arith.mulf %90, %72 : vector<8x128xf32>
    %93 = arith.mulf %89, %88 : vector<8x128xf32>
    %94 = arith.addf %92, %93 : vector<8x128xf32>
    %95 = math.tanh %94 : vector<8x128xf32>
    %96 = arith.mulf %91, %95 : vector<8x128xf32>
    %97 = arith.mulf %96, %3 : vector<8x128xf32>
    %cst_22 = arith.constant dense<0.000000e+00> : vector<8xf32>
    %98 = vector.multi_reduction <add>, %97, %cst_22 [1] : vector<8x128xf32> to vector<8xf32>
    %99 = vector.shape_cast %98 : vector<8xf32> to vector<8x1xf32>
    %100 = vector.extract_strided_slice %9 {offsets = [32, 0], sizes = [8, 512], strides = [1, 1]} : vector<64x512xf32> to vector<8x512xf32>
    %cst_23 = arith.constant dense<0.000000e+00> : vector<8x512xf32>
    %101 = tpu.matmul %96, %0, %cst_23 {dimension_numbers = #tpu.dot_dimension_numbers<[1], [0], [0], [1], [0, 0, 1, 1], [], []>} : vector<8x128xf32>, vector<128x512xf32>, vector<8x512xf32> -> vector<8x512xf32>
    %102 = arith.addf %100, %101 : vector<8x512xf32>
    %103 = vector.extract_strided_slice %102 {offsets = [0, 0], sizes = [8, 384], strides = [1, 1]} : vector<8x512xf32> to vector<8x384xf32>
    %104 = arith.negf %103 : vector<8x384xf32>
    %105 = math.exp %104 : vector<8x384xf32>
    %cst_24 = arith.constant 1.000000e+00 : f32
    %106 = vector.broadcast %cst_24 : f32 to vector<8x384xf32>
    %107 = arith.addf %106, %105 : vector<8x384xf32>
    %108 = arith.divf %106, %107 : vector<8x384xf32>
    %109 = vector.extract_strided_slice %102 {offsets = [0, 384], sizes = [8, 128], strides = [1, 1]} : vector<8x512xf32> to vector<8x128xf32>
    %110 = math.tanh %109 : vector<8x128xf32>
    %111 = vector.extract_strided_slice %108 {offsets = [0, 0], sizes = [8, 128], strides = [1, 1]} : vector<8x384xf32> to vector<8x128xf32>
    %112 = vector.extract_strided_slice %108 {offsets = [0, 128], sizes = [8, 128], strides = [1, 1]} : vector<8x384xf32> to vector<8x128xf32>
    %113 = vector.extract_strided_slice %108 {offsets = [0, 256], sizes = [8, 128], strides = [1, 1]} : vector<8x384xf32> to vector<8x128xf32>
    %114 = arith.mulf %112, %94 : vector<8x128xf32>
    %115 = arith.mulf %111, %110 : vector<8x128xf32>
    %116 = arith.addf %114, %115 : vector<8x128xf32>
    %117 = math.tanh %116 : vector<8x128xf32>
    %118 = arith.mulf %113, %117 : vector<8x128xf32>
    %119 = arith.mulf %118, %3 : vector<8x128xf32>
    %cst_25 = arith.constant dense<0.000000e+00> : vector<8xf32>
    %120 = vector.multi_reduction <add>, %119, %cst_25 [1] : vector<8x128xf32> to vector<8xf32>
    %121 = vector.shape_cast %120 : vector<8xf32> to vector<8x1xf32>
    %122 = vector.extract_strided_slice %9 {offsets = [40, 0], sizes = [8, 512], strides = [1, 1]} : vector<64x512xf32> to vector<8x512xf32>
    %cst_26 = arith.constant dense<0.000000e+00> : vector<8x512xf32>
    %123 = tpu.matmul %118, %0, %cst_26 {dimension_numbers = #tpu.dot_dimension_numbers<[1], [0], [0], [1], [0, 0, 1, 1], [], []>} : vector<8x128xf32>, vector<128x512xf32>, vector<8x512xf32> -> vector<8x512xf32>
    %124 = arith.addf %122, %123 : vector<8x512xf32>
    %125 = vector.extract_strided_slice %124 {offsets = [0, 0], sizes = [8, 384], strides = [1, 1]} : vector<8x512xf32> to vector<8x384xf32>
    %126 = arith.negf %125 : vector<8x384xf32>
    %127 = math.exp %126 : vector<8x384xf32>
    %cst_27 = arith.constant 1.000000e+00 : f32
    %128 = vector.broadcast %cst_27 : f32 to vector<8x384xf32>
    %129 = arith.addf %128, %127 : vector<8x384xf32>
    %130 = arith.divf %128, %129 : vector<8x384xf32>
    %131 = vector.extract_strided_slice %124 {offsets = [0, 384], sizes = [8, 128], strides = [1, 1]} : vector<8x512xf32> to vector<8x128xf32>
    %132 = math.tanh %131 : vector<8x128xf32>
    %133 = vector.extract_strided_slice %130 {offsets = [0, 0], sizes = [8, 128], strides = [1, 1]} : vector<8x384xf32> to vector<8x128xf32>
    %134 = vector.extract_strided_slice %130 {offsets = [0, 128], sizes = [8, 128], strides = [1, 1]} : vector<8x384xf32> to vector<8x128xf32>
    %135 = vector.extract_strided_slice %130 {offsets = [0, 256], sizes = [8, 128], strides = [1, 1]} : vector<8x384xf32> to vector<8x128xf32>
    %136 = arith.mulf %134, %116 : vector<8x128xf32>
    %137 = arith.mulf %133, %132 : vector<8x128xf32>
    %138 = arith.addf %136, %137 : vector<8x128xf32>
    %139 = math.tanh %138 : vector<8x128xf32>
    %140 = arith.mulf %135, %139 : vector<8x128xf32>
    %141 = arith.mulf %140, %3 : vector<8x128xf32>
    %cst_28 = arith.constant dense<0.000000e+00> : vector<8xf32>
    %142 = vector.multi_reduction <add>, %141, %cst_28 [1] : vector<8x128xf32> to vector<8xf32>
    %143 = vector.shape_cast %142 : vector<8xf32> to vector<8x1xf32>
    %144 = vector.extract_strided_slice %9 {offsets = [48, 0], sizes = [8, 512], strides = [1, 1]} : vector<64x512xf32> to vector<8x512xf32>
    %cst_29 = arith.constant dense<0.000000e+00> : vector<8x512xf32>
    %145 = tpu.matmul %140, %0, %cst_29 {dimension_numbers = #tpu.dot_dimension_numbers<[1], [0], [0], [1], [0, 0, 1, 1], [], []>} : vector<8x128xf32>, vector<128x512xf32>, vector<8x512xf32> -> vector<8x512xf32>
    %146 = arith.addf %144, %145 : vector<8x512xf32>
    %147 = vector.extract_strided_slice %146 {offsets = [0, 0], sizes = [8, 384], strides = [1, 1]} : vector<8x512xf32> to vector<8x384xf32>
    %148 = arith.negf %147 : vector<8x384xf32>
    %149 = math.exp %148 : vector<8x384xf32>
    %cst_30 = arith.constant 1.000000e+00 : f32
    %150 = vector.broadcast %cst_30 : f32 to vector<8x384xf32>
    %151 = arith.addf %150, %149 : vector<8x384xf32>
    %152 = arith.divf %150, %151 : vector<8x384xf32>
    %153 = vector.extract_strided_slice %146 {offsets = [0, 384], sizes = [8, 128], strides = [1, 1]} : vector<8x512xf32> to vector<8x128xf32>
    %154 = math.tanh %153 : vector<8x128xf32>
    %155 = vector.extract_strided_slice %152 {offsets = [0, 0], sizes = [8, 128], strides = [1, 1]} : vector<8x384xf32> to vector<8x128xf32>
    %156 = vector.extract_strided_slice %152 {offsets = [0, 128], sizes = [8, 128], strides = [1, 1]} : vector<8x384xf32> to vector<8x128xf32>
    %157 = vector.extract_strided_slice %152 {offsets = [0, 256], sizes = [8, 128], strides = [1, 1]} : vector<8x384xf32> to vector<8x128xf32>
    %158 = arith.mulf %156, %138 : vector<8x128xf32>
    %159 = arith.mulf %155, %154 : vector<8x128xf32>
    %160 = arith.addf %158, %159 : vector<8x128xf32>
    %161 = math.tanh %160 : vector<8x128xf32>
    %162 = arith.mulf %157, %161 : vector<8x128xf32>
    %163 = arith.mulf %162, %3 : vector<8x128xf32>
    %cst_31 = arith.constant dense<0.000000e+00> : vector<8xf32>
    %164 = vector.multi_reduction <add>, %163, %cst_31 [1] : vector<8x128xf32> to vector<8xf32>
    %165 = vector.shape_cast %164 : vector<8xf32> to vector<8x1xf32>
    %166 = vector.extract_strided_slice %9 {offsets = [56, 0], sizes = [8, 512], strides = [1, 1]} : vector<64x512xf32> to vector<8x512xf32>
    %cst_32 = arith.constant dense<0.000000e+00> : vector<8x512xf32>
    %167 = tpu.matmul %162, %0, %cst_32 {dimension_numbers = #tpu.dot_dimension_numbers<[1], [0], [0], [1], [0, 0, 1, 1], [], []>} : vector<8x128xf32>, vector<128x512xf32>, vector<8x512xf32> -> vector<8x512xf32>
    %168 = arith.addf %166, %167 : vector<8x512xf32>
    %169 = vector.extract_strided_slice %168 {offsets = [0, 0], sizes = [8, 384], strides = [1, 1]} : vector<8x512xf32> to vector<8x384xf32>
    %170 = arith.negf %169 : vector<8x384xf32>
    %171 = math.exp %170 : vector<8x384xf32>
    %cst_33 = arith.constant 1.000000e+00 : f32
    %172 = vector.broadcast %cst_33 : f32 to vector<8x384xf32>
    %173 = arith.addf %172, %171 : vector<8x384xf32>
    %174 = arith.divf %172, %173 : vector<8x384xf32>
    %175 = vector.extract_strided_slice %168 {offsets = [0, 384], sizes = [8, 128], strides = [1, 1]} : vector<8x512xf32> to vector<8x128xf32>
    %176 = math.tanh %175 : vector<8x128xf32>
    %177 = vector.extract_strided_slice %174 {offsets = [0, 0], sizes = [8, 128], strides = [1, 1]} : vector<8x384xf32> to vector<8x128xf32>
    %178 = vector.extract_strided_slice %174 {offsets = [0, 128], sizes = [8, 128], strides = [1, 1]} : vector<8x384xf32> to vector<8x128xf32>
    %179 = vector.extract_strided_slice %174 {offsets = [0, 256], sizes = [8, 128], strides = [1, 1]} : vector<8x384xf32> to vector<8x128xf32>
    %180 = arith.mulf %178, %160 : vector<8x128xf32>
    %181 = arith.mulf %177, %176 : vector<8x128xf32>
    %182 = arith.addf %180, %181 : vector<8x128xf32>
    %183 = math.tanh %182 : vector<8x128xf32>
    %184 = arith.mulf %179, %183 : vector<8x128xf32>
    %185 = arith.mulf %184, %3 : vector<8x128xf32>
    %cst_34 = arith.constant dense<0.000000e+00> : vector<8xf32>
    %186 = vector.multi_reduction <add>, %185, %cst_34 [1] : vector<8x128xf32> to vector<8xf32>
    %187 = vector.shape_cast %186 : vector<8xf32> to vector<8x1xf32>
    %188 = tpu.concatenate %33, %55, %77, %99, %121, %143, %165, %187 in 1 : vector<8x1xf32>, vector<8x1xf32>, vector<8x1xf32>, vector<8x1xf32>, vector<8x1xf32>, vector<8x1xf32>, vector<8x1xf32>, vector<8x1xf32> -> vector<8x8xf32>
    %c0_35 = arith.constant 0 : index
    %c0_36 = arith.constant 0 : index
    %189 = vector.load %arg5[%c0_35, %c0_36] : memref<1x1xf32, #tpu.memory_space<vmem>>, vector<1x1xf32>
    %190 = vector.broadcast %189 : vector<1x1xf32> to vector<8x8xf32>
    %191 = arith.addf %188, %190 : vector<8x8xf32>
    %c0_37 = arith.constant 0 : index
    %c0_38 = arith.constant 0 : index
    %192 = vector.load %arg6[%c0_37, %c0_38] : memref<8x8xf32, #tpu.memory_space<vmem>>, vector<8x8xf32>
    tpu.vector_store %arg6[%c0_37, %c0_38], %191 {strides = array<i32>} : memref<8x8xf32, #tpu.memory_space<vmem>>, vector<8x8xf32>,
    return
  }
}

</mosaic_0001>

<llo_original>
// kernel: tpu_custom_call.1
$region0: #{tpu_custom_call.1}
  #allocation0 [shape = 'u32[]', space=smem, size = 0x4, offset = 0x4, fixed_abs, tag = 'smem constant byte address 0x4 - core index']
  #allocation1 [shape = 'u32[144,128]{1,0:T(1,128)}', space=vmem, size = 0x12000, scoped, tag = 'internal scratch']
  #allocation2 [shape = 'f32[1,1]{1,0:T(1,128)S(1)}', space=vmem, size = 0x200, scoped, tag = 'scoped memory for tpu_custom_call.1']
  %s0 = inlined_call_operand.vmem [shape: f32[64,8], index: 0, kind: input, shape index: {}]
  %s1 = inlined_call_operand.vmem [shape: f32[8,512], index: 1, kind: input, shape index: {}]
  %s2 = inlined_call_operand.hbm [shape: f32[128,512], index: 2, kind: input, shape index: {}]
  %s3 = inlined_call_operand.vmem [shape: f32[1,512], index: 3, kind: input, shape index: {}]
  %s4 = inlined_call_operand.vmem [shape: f32[1,128], index: 4, kind: input, shape index: {}]
  %s5 = inlined_call_operand.<no memory space> [shape: f32[1,1], index: 5, kind: input, shape index: {}]
  %s6 = inlined_call_operand.hbm [shape: f32[8,8], index: 6, kind: output, shape index: {}]
  %s7 = sld [smem:[#allocation0]]
  $region38: #{tpu_custom_call.1} parent=0
    _
  %s9 = ssub.s32 1, %s7
  %s10 = scalar_select 0, %s9, %s7
  %v11 = vstv %s5
  %12 = vst [vmem:[#allocation2] sm:$0x1] %v11
  $region1: #{tpu_custom_call.1} parent=0
    #allocation3 [shape = 'u8[262144]{0}', space=vmem, size = 0x40000, scoped, tag = 'input window, operand 2, single buffered']
    #allocation4 [shape = 's32[1]{0}', space=sflag, size = 0x4, scoped, tag = 'scoped memory for tpu_custom_call.1']
    #allocation5 [shape = 's32[1]{0}', space=sflag, size = 0x4, scoped, tag = 'scoped memory for tpu_custom_call.1']
    #allocation6 [shape = 'u8[4096]{0}', space=vmem, size = 0x1000, scoped, tag = 'output window, operand 0, single buffered']
    %13 = vsyncpa [#allocation4], 0
    %14 = vsyncpa [#allocation5], 0
    // Predicated region
    $region2: #{tpu_custom_call.1} parent=1 // pred_check
      _
    $region3: #{tpu_custom_call.1} parent=1 // pred_check_branch
      %16 = sbr.rel (0) target = $region5
    $region4: #{tpu_custom_call.1} parent=1 // pred_region
      _
    $region5: #{tpu_custom_call.1} parent=1 // pred_fallthru
      _
    // Predicated region
    $region6: #{tpu_custom_call.1} parent=1 // pred_check
      _
    $region7: #{tpu_custom_call.1} parent=1 // pred_check_branch
      %18 = sbr.rel (0) target = $region9
    $region8: #{tpu_custom_call.1} parent=1 // pred_region
      _
    $region9: #{tpu_custom_call.1} parent=1 // pred_fallthru
      _
    // Predicated region
    $region10: #{tpu_custom_call.1} parent=1 // pred_check
      _
    $region11: #{tpu_custom_call.1} parent=1 // pred_check_branch
      %20 = sbr.rel (0) target = $region13
    $region12: #{tpu_custom_call.1} parent=1 // pred_region
      %s22 = ssub.s32 8192, 8192
      %23 = vsyncadd [#allocation4], %s22
      %s24 = sshll.u32 [#allocation3], 4
      %s25 = int_to_ptr.vmem [resolvable:$true] %s24
      %30 = dma.hbm_to_vmem [thread:$0]  %s2, 8192, %s25, [#allocation4], 512, 512, 32
    $region13: #{tpu_custom_call.1} parent=1 // pred_fallthru
      _
    // Predicated region
    $region14: #{tpu_custom_call.1} parent=1 // pred_check
      _
    $region15: #{tpu_custom_call.1} parent=1 // pred_check_branch
      %32 = sbr.rel (0) target = $region17
    $region16: #{tpu_custom_call.1} parent=1 // pred_region
      _
    $region17: #{tpu_custom_call.1} parent=1 // pred_fallthru
      _
    // Predicated region
    $region18: #{tpu_custom_call.1} parent=1 // pred_check
      _
    $region19: #{tpu_custom_call.1} parent=1 // pred_check_branch
      %34 = sbr.rel (0) target = $region21
    $region20: #{tpu_custom_call.1} parent=1 // pred_region
      _
    $region21: #{tpu_custom_call.1} parent=1 // pred_fallthru
      _
    // Predicated region
    $region22: #{tpu_custom_call.1} parent=1 // pred_check
      _
    $region23: #{tpu_custom_call.1} parent=1 // pred_check_branch
      %36 = sbr.rel (0) target = $region25
    $region24: #{tpu_custom_call.1} parent=1 // pred_region
      _
    $region25: #{tpu_custom_call.1} parent=1 // pred_fallthru
      _
    // Predicated region
    $region26: #{tpu_custom_call.1} parent=1 // pred_check
      _
    $region27: #{tpu_custom_call.1} parent=1 // pred_check_branch
      %38 = sbr.rel (0) target = $region29
    $region28: #{tpu_custom_call.1} parent=1 // pred_region
      %39 = dma.done [#allocation4], 8192
    $region29: #{tpu_custom_call.1} parent=1 // pred_fallthru
      _
    %v40 = vld [vmem:[#allocation3] sm:$0xff]
    %v41 = vld [vmem:[#allocation3 + $0x8] sm:$0xff]
    %v42 = vld [vmem:[#allocation3 + $0x10] sm:$0xff]
    %v43 = vld [vmem:[#allocation3 + $0x18] sm:$0xff]
    %v44 = vld [vmem:[#allocation3 + $0x20] sm:$0xff]
    %v45 = vld [vmem:[#allocation3 + $0x28] sm:$0xff]
    %v46 = vld [vmem:[#allocation3 + $0x30] sm:$0xff]
    %v47 = vld [vmem:[#allocation3 + $0x38] sm:$0xff]
    %v48 = vld [vmem:[#allocation3 + $0x40] sm:$0xff]
    %v49 = vld [vmem:[#allocation3 + $0x48] sm:$0xff]
    %v50 = vld [vmem:[#allocation3 + $0x50] sm:$0xff]
    %v51 = vld [vmem:[#allocation3 + $0x58] sm:$0xff]
    %v52 = vld [vmem:[#allocation3 + $0x60] sm:$0xff]
    %v53 = vld [vmem:[#allocation3 + $0x68] sm:$0xff]
    %v54 = vld [vmem:[#allocation3 + $0x70] sm:$0xff]
    %v55 = vld [vmem:[#allocation3 + $0x78] sm:$0xff]
    %v56 = vld [vmem:[#allocation3 + $0x80] sm:$0xff]
    %v57 = vld [vmem:[#allocation3 + $0x88] sm:$0xff]
    %v58 = vld [vmem:[#allocation3 + $0x90] sm:$0xff]
    %v59 = vld [vmem:[#allocation3 + $0x98] sm:$0xff]
    %v60 = vld [vmem:[#allocation3 + $0xa0] sm:$0xff]
    %v61 = vld [vmem:[#allocation3 + $0xa8] sm:$0xff]
    %v62 = vld [vmem:[#allocation3 + $0xb0] sm:$0xff]
    %v63 = vld [vmem:[#allocation3 + $0xb8] sm:$0xff]
    %v64 = vld [vmem:[#allocation3 + $0xc0] sm:$0xff]
    %v65 = vld [vmem:[#allocation3 + $0xc8] sm:$0xff]
    %v66 = vld [vmem:[#allocation3 + $0xd0] sm:$0xff]
    %v67 = vld [vmem:[#allocation3 + $0xd8] sm:$0xff]
    %v68 = vld [vmem:[#allocation3 + $0xe0] sm:$0xff]
    %v69 = vld [vmem:[#allocation3 + $0xe8] sm:$0xff]
    %v70 = vld [vmem:[#allocation3 + $0xf0] sm:$0xff]
    %v71 = vld [vmem:[#allocation3 + $0xf8] sm:$0xff]
    %v72 = vld [vmem:[#allocation3 + $0x100] sm:$0xff]
    %v73 = vld [vmem:[#allocation3 + $0x108] sm:$0xff]
    %v74 = vld [vmem:[#allocation3 + $0x110] sm:$0xff]
    %v75 = vld [vmem:[#allocation3 + $0x118] sm:$0xff]
    %v76 = vld [vmem:[#allocation3 + $0x120] sm:$0xff]
    %v77 = vld [vmem:[#allocation3 + $0x128] sm:$0xff]
    %v78 = vld [vmem:[#allocation3 + $0x130] sm:$0xff]
    %v79 = vld [vmem:[#allocation3 + $0x138] sm:$0xff]
    %v80 = vld [vmem:[#allocation3 + $0x140] sm:$0xff]
    %v81 = vld [vmem:[#allocation3 + $0x148] sm:$0xff]
    %v82 = vld [vmem:[#allocation3 + $0x150] sm:$0xff]
    %v83 = vld [vmem:[#allocation3 + $0x158] sm:$0xff]
    %v84 = vld [vmem:[#allocation3 + $0x160] sm:$0xff]
    %v85 = vld [vmem:[#allocation3 + $0x168] sm:$0xff]
    %v86 = vld [vmem:[#allocation3 + $0x170] sm:$0xff]
    %v87 = vld [vmem:[#allocation3 + $0x178] sm:$0xff]
    %v88 = vld [vmem:[#allocation3 + $0x180] sm:$0xff]
    %v89 = vld [vmem:[#allocation3 + $0x188] sm:$0xff]
    %v90 = vld [vmem:[#allocation3 + $0x190] sm:$0xff]
    %v91 = vld [vmem:[#allocation3 + $0x198] sm:$0xff]
    %v92 = vld [vmem:[#allocation3 + $0x1a0] sm:$0xff]
    %v93 = vld [vmem:[#allocation3 + $0x1a8] sm:$0xff]
    %v94 = vld [vmem:[#allocation3 + $0x1b0] sm:$0xff]
    %v95 = vld [vmem:[#allocation3 + $0x1b8] sm:$0xff]
    %v96 = vld [vmem:[#allocation3 + $0x1c0] sm:$0xff]
    %v97 = vld [vmem:[#allocation3 + $0x1c8] sm:$0xff]
    %v98 = vld [vmem:[#allocation3 + $0x1d0] sm:$0xff]
    %v99 = vld [vmem:[#allocation3 + $0x1d8] sm:$0xff]
    %v100 = vld [vmem:[#allocation3 + $0x1e0] sm:$0xff]
    %v101 = vld [vmem:[#allocation3 + $0x1e8] sm:$0xff]
    %v102 = vld [vmem:[#allocation3 + $0x1f0] sm:$0xff]
    %v103 = vld [vmem:[#allocation3 + $0x1f8] sm:$0xff]
    %v104 = vld [vmem:[%s4] sm:$0x1]
    %v106 = vlaneseq
    %v107 = vshrl.u32 %v106, 7
    %v108 = vsub.s32 0, %v107
    %v109 = vrot.slane %v104, %v108
    %v111 = vld [vmem:[%s0] sm:$0xff]
    %v112 = vld [vmem:[%s0 + $0x8] sm:$0xff]
    %v113 = vld [vmem:[%s0 + $0x10] sm:$0xff]
    %v114 = vld [vmem:[%s0 + $0x18] sm:$0xff]
    %v115 = vld [vmem:[%s0 + $0x20] sm:$0xff]
    %v116 = vld [vmem:[%s0 + $0x28] sm:$0xff]
    %v117 = vld [vmem:[%s0 + $0x30] sm:$0xff]
    %v118 = vld [vmem:[%s0 + $0x38] sm:$0xff]
    %v119 = vld [vmem:[%s1] sm:$0xff]
    %v120 = vld [vmem:[%s1 + $0x8] sm:$0xff]
    %v121 = vld [vmem:[%s1 + $0x10] sm:$0xff]
    %v122 = vld [vmem:[%s1 + $0x18] sm:$0xff]
    %v123 = vld [vmem:[%s3] sm:$0xf]
    %v125 = vlaneseq
    %v126 = vshrl.u32 %v125, 7
    %v127 = vsub.s32 0, %v126
    %v128 = vrot.slane %v123, %v127
    %v129 = vlaneseq
    %v130 = vshrl.u32 %v129, 7
    %v131 = vsub.s32 1, %v130
    %v132 = vrot.slane %v123, %v131
    %v133 = vlaneseq
    %v134 = vshrl.u32 %v133, 7
    %v135 = vsub.s32 2, %v134
    %v136 = vrot.slane %v123, %v135
    %v137 = vlaneseq
    %v138 = vshrl.u32 %v137, 7
    %v139 = vsub.s32 3, %v138
    %v140 = vrot.slane %v123, %v139
    %vm145 = vcmask 64512
    %v147 = vsel %vm145, %v111, 0
    %v150 = vsel %vm145, %v112, 0
    %v153 = vsel %vm145, %v113, 0
    %v156 = vsel %vm145, %v114, 0
    %v159 = vsel %vm145, %v115, 0
    %v162 = vsel %vm145, %v116, 0
    %v165 = vsel %vm145, %v117, 0
    %v168 = vsel %vm145, %v118, 0
    %170 = vmatprep.subr.mxu0 %v120
    %171 = vmatpush1.msra.mxu0 %v119
    %172 = vmatprep.subr.mxu0 0.0
    %173 = vmatpush1.msra.mxu0 0.0
    %174 = vmatprep.subr.mxu0 0.0
    %175 = vmatpush1.msra.mxu0 0.0
    %176 = vmatprep.subr.mxu0 0.0
    %177 = vmatpush1.msra.mxu0 0.0
    %178 = vmatprep.subr.mxu0 0.0
    %179 = vmatpush1.msra.mxu0 0.0
    %180 = vmatprep.subr.mxu0 0.0
    %181 = vmatpush1.msra.mxu0 0.0
    %182 = vmatprep.subr.mxu0 0.0
    %183 = vmatpush1.msra.mxu0 0.0
    %184 = vmatprep.subr.mxu0 0.0
    %185 = vmatpush1.msra.mxu0 0.0
    %186 = vmatprep.subr.mxu0 0.0
    %187 = vmatpush1.msra.mxu0 0.0
    %188 = vmatprep.subr.mxu0 0.0
    %189 = vmatpush1.msra.mxu0 0.0
    %190 = vmatprep.subr.mxu0 0.0
    %191 = vmatpush1.msra.mxu0 0.0
    %192 = vmatprep.subr.mxu0 0.0
    %193 = vmatpush1.msra.mxu0 0.0
    %194 = vmatprep.subr.mxu0 0.0
    %195 = vmatpush1.msra.mxu0 0.0
    %196 = vmatprep.subr.mxu0 0.0
    %197 = vmatpush1.msra.mxu0 0.0
    %198 = vmatprep.subr.mxu0 0.0
    %199 = vmatpush1.msra.mxu0 0.0
    %200 = vmatprep.subr.mxu0 0.0
    %201 = vmatpush1.msra.mxu0 0.0
    %202 = vmatprep.subr.mxu0 0.0
    %203 = vmatpush1.msra.mxu0 0.0
    %204 = vmatprep.subr.mxu0 0.0
    %205 = vmatpush1.msra.mxu0 0.0
    %206 = vmatprep.subr.mxu0 0.0
    %207 = vmatpush1.msra.mxu0 0.0
    %208 = vmatprep.subr.mxu0 0.0
    %209 = vmatpush1.msra.mxu0 0.0
    %210 = vmatprep.subr.mxu0 0.0
    %211 = vmatpush1.msra.mxu0 0.0
    %212 = vmatprep.subr.mxu0 0.0
    %213 = vmatpush1.msra.mxu0 0.0
    %214 = vmatprep.subr.mxu0 0.0
    %215 = vmatpush1.msra.mxu0 0.0
    %216 = vmatprep.subr.mxu0 0.0
    %217 = vmatpush1.msra.mxu0 0.0
    %218 = vmatprep.subr.mxu0 0.0
    %219 = vmatpush1.msra.mxu0 0.0
    %220 = vmatprep.subr.mxu0 0.0
    %221 = vmatpush1.msra.mxu0 0.0
    %222 = vmatprep.subr.mxu0 0.0
    %223 = vmatpush1.msra.mxu0 0.0
    %224 = vmatprep.subr.mxu0 0.0
    %225 = vmatpush1.msra.mxu0 0.0
    %226 = vmatprep.subr.mxu0 0.0
    %227 = vmatpush1.msra.mxu0 0.0
    %228 = vmatprep.subr.mxu0 0.0
    %229 = vmatpush1.msra.mxu0 0.0
    %230 = vmatprep.subr.mxu0 0.0
    %231 = vmatpush1.msra.mxu0 0.0
    %232 = vmatprep.subr.mxu0 0.0
    %233 = vmatpush1.msra.mxu0 0.0
    %234 = vmatprep.mubr.f32.mxu0 0.0
    %235 = vmatmul.mubr.f32.gmra.mrb[0].mxu0 %v147
    %v236 = vpop.f32.mrb[0].mxu0
    %v237 = vadd.f32 %v128, %v236
    %v238 = vpop.f32.mrb[0].mxu0
    %v239 = vadd.f32 %v132, %v238
    %240 = vmatprep.mubr.f32.mxu0 0.0
    %241 = vmatmul.mubr.f32.gmra.mrb[0].mxu0 %v150
    %v242 = vpop.f32.mrb[0].mxu0
    %v243 = vadd.f32 %v128, %v242
    %v244 = vpop.f32.mrb[0].mxu0
    %v245 = vadd.f32 %v132, %v244
    %246 = vmatprep.mubr.f32.mxu0 0.0
    %247 = vmatmul.mubr.f32.gmra.mrb[0].mxu0 %v153
    %v248 = vpop.f32.mrb[0].mxu0
    %v249 = vadd.f32 %v128, %v248
    %v250 = vpop.f32.mrb[0].mxu0
    %v251 = vadd.f32 %v132, %v250
    %252 = vmatprep.mubr.f32.mxu0 0.0
    %253 = vmatmul.mubr.f32.gmra.mrb[0].mxu0 %v156
    %v254 = vpop.f32.mrb[0].mxu0
    %v255 = vadd.f32 %v128, %v254
    %v256 = vpop.f32.mrb[0].mxu0
    %v257 = vadd.f32 %v132, %v256
    %258 = vmatprep.mubr.f32.mxu0 0.0
    %259 = vmatmul.mubr.f32.gmra.mrb[0].mxu0 %v159
    %v260 = vpop.f32.mrb[0].mxu0
    %v261 = vadd.f32 %v128, %v260
    %v262 = vpop.f32.mrb[0].mxu0
    %v263 = vadd.f32 %v132, %v262
    %264 = vmatprep.mubr.f32.mxu0 0.0
    %265 = vmatmul.mubr.f32.gmra.mrb[0].mxu0 %v162
    %v266 = vpop.f32.mrb[0].mxu0
    %v267 = vadd.f32 %v128, %v266
    %v268 = vpop.f32.mrb[0].mxu0
    %v269 = vadd.f32 %v132, %v268
    %270 = vmatprep.mubr.f32.mxu0 0.0
    %271 = vmatmul.mubr.f32.gmra.mrb[0].mxu0 %v165
    %v272 = vpop.f32.mrb[0].mxu0
    %v273 = vadd.f32 %v128, %v272
    %v274 = vpop.f32.mrb[0].mxu0
    %v275 = vadd.f32 %v132, %v274
    %276 = vmatprep.mubr.f32.mxu0 0.0
    %277 = vmatmul.mubr.f32.gmra.mrb[0].mxu0 %v168
    %v278 = vpop.f32.mrb[0].mxu0
    %v279 = vadd.f32 %v128, %v278
    %v280 = vpop.f32.mrb[0].mxu0
    %v281 = vadd.f32 %v132, %v280
    %282 = vdwg.mxu0
    %283 = vmatprep.subr.mxu0 %v122
    %284 = vmatpush1.msra.mxu0 %v121
    %285 = vmatprep.subr.mxu0 0.0
    %286 = vmatpush1.msra.mxu0 0.0
    %287 = vmatprep.subr.mxu0 0.0
    %288 = vmatpush1.msra.mxu0 0.0
    %289 = vmatprep.subr.mxu0 0.0
    %290 = vmatpush1.msra.mxu0 0.0
    %291 = vmatprep.subr.mxu0 0.0
    %292 = vmatpush1.msra.mxu0 0.0
    %293 = vmatprep.subr.mxu0 0.0
    %294 = vmatpush1.msra.mxu0 0.0
    %295 = vmatprep.subr.mxu0 0.0
    %296 = vmatpush1.msra.mxu0 0.0
    %297 = vmatprep.subr.mxu0 0.0
    %298 = vmatpush1.msra.mxu0 0.0
    %299 = vmatprep.subr.mxu0 0.0
    %300 = vmatpush1.msra.mxu0 0.0
    %301 = vmatprep.subr.mxu0 0.0
    %302 = vmatpush1.msra.mxu0 0.0
    %303 = vmatprep.subr.mxu0 0.0
    %304 = vmatpush1.msra.mxu0 0.0
    %305 = vmatprep.subr.mxu0 0.0
    %306 = vmatpush1.msra.mxu0 0.0
    %307 = vmatprep.subr.mxu0 0.0
    %308 = vmatpush1.msra.mxu0 0.0
    %309 = vmatprep.subr.mxu0 0.0
    %310 = vmatpush1.msra.mxu0 0.0
    %311 = vmatprep.subr.mxu0 0.0
    %312 = vmatpush1.msra.mxu0 0.0
    %313 = vmatprep.subr.mxu0 0.0
    %314 = vmatpush1.msra.mxu0 0.0
    %315 = vmatprep.subr.mxu0 0.0
    %316 = vmatpush1.msra.mxu0 0.0
    %317 = vmatprep.subr.mxu0 0.0
    %318 = vmatpush1.msra.mxu0 0.0
    %319 = vmatprep.subr.mxu0 0.0
    %320 = vmatpush1.msra.mxu0 0.0
    %321 = vmatprep.subr.mxu0 0.0
    %322 = vmatpush1.msra.mxu0 0.0
    %323 = vmatprep.subr.mxu0 0.0
    %324 = vmatpush1.msra.mxu0 0.0
    %325 = vmatprep.subr.mxu0 0.0
    %326 = vmatpush1.msra.mxu0 0.0
    %327 = vmatprep.subr.mxu0 0.0
    %328 = vmatpush1.msra.mxu0 0.0
    %329 = vmatprep.subr.mxu0 0.0
    %330 = vmatpush1.msra.mxu0 0.0
    %331 = vmatprep.subr.mxu0 0.0
    %332 = vmatpush1.msra.mxu0 0.0
    %333 = vmatprep.subr.mxu0 0.0
    %334 = vmatpush1.msra.mxu0 0.0
    %335 = vmatprep.subr.mxu0 0.0
    %336 = vmatpush1.msra.mxu0 0.0
    %337 = vmatprep.subr.mxu0 0.0
    %338 = vmatpush1.msra.mxu0 0.0
    %339 = vmatprep.subr.mxu0 0.0
    %340 = vmatpush1.msra.mxu0 0.0
    %341 = vmatprep.subr.mxu0 0.0
    %342 = vmatpush1.msra.mxu0 0.0
    %343 = vmatprep.subr.mxu0 0.0
    %344 = vmatpush1.msra.mxu0 0.0
    %345 = vmatprep.subr.mxu0 0.0
    %346 = vmatpush1.msra.mxu0 0.0
    %347 = vmatprep.mubr.f32.mxu0 0.0
    %348 = vmatmul.mubr.f32.gmra.mrb[0].mxu0 %v147
    %v349 = vpop.f32.mrb[0].mxu0
    %v350 = vadd.f32 %v136, %v349
    %v351 = vpop.f32.mrb[0].mxu0
    %v352 = vadd.f32 %v140, %v351
    %353 = vmatprep.mubr.f32.mxu0 0.0
    %354 = vmatmul.mubr.f32.gmra.mrb[0].mxu0 %v150
    %v355 = vpop.f32.mrb[0].mxu0
    %v356 = vadd.f32 %v136, %v355
    %v357 = vpop.f32.mrb[0].mxu0
    %v358 = vadd.f32 %v140, %v357
    %359 = vmatprep.mubr.f32.mxu0 0.0
    %360 = vmatmul.mubr.f32.gmra.mrb[0].mxu0 %v153
    %v361 = vpop.f32.mrb[0].mxu0
    %v362 = vadd.f32 %v136, %v361
    %v363 = vpop.f32.mrb[0].mxu0
    %v364 = vadd.f32 %v140, %v363
    %365 = vmatprep.mubr.f32.mxu0 0.0
    %366 = vmatmul.mubr.f32.gmra.mrb[0].mxu0 %v156
    %v367 = vpop.f32.mrb[0].mxu0
    %v368 = vadd.f32 %v136, %v367
    %v369 = vpop.f32.mrb[0].mxu0
    %v370 = vadd.f32 %v140, %v369
    %371 = vmatprep.mubr.f32.mxu0 0.0
    %372 = vmatmul.mubr.f32.gmra.mrb[0].mxu0 %v159
    %v373 = vpop.f32.mrb[0].mxu0
    %v374 = vadd.f32 %v136, %v373
    %v375 = vpop.f32.mrb[0].mxu0
    %v376 = vadd.f32 %v140, %v375
    %377 = vmatprep.mubr.f32.mxu0 0.0
    %378 = vmatmul.mubr.f32.gmra.mrb[0].mxu0 %v162
    %v379 = vpop.f32.mrb[0].mxu0
    %v380 = vadd.f32 %v136, %v379
    %v381 = vpop.f32.mrb[0].mxu0
    %v382 = vadd.f32 %v140, %v381
    %383 = vmatprep.mubr.f32.mxu0 0.0
    %384 = vmatmul.mubr.f32.gmra.mrb[0].mxu0 %v165
    %v385 = vpop.f32.mrb[0].mxu0
    %v386 = vadd.f32 %v136, %v385
    %v387 = vpop.f32.mrb[0].mxu0
    %v388 = vadd.f32 %v140, %v387
    %389 = vmatprep.mubr.f32.mxu0 0.0
    %390 = vmatmul.mubr.f32.gmra.mrb[0].mxu0 %v168
    %v391 = vpop.f32.mrb[0].mxu0
    %v392 = vadd.f32 %v136, %v391
    %v393 = vpop.f32.mrb[0].mxu0
    %v394 = vadd.f32 %v140, %v393
    %395 = vdwg.mxu0
    %396 = vmatprep.subr.mxu0 %v41
    %397 = vmatpush1.msra.mxu0 %v40
    %398 = vmatprep.subr.mxu0 %v45
    %399 = vmatpush1.msra.mxu0 %v44
    %400 = vmatprep.subr.mxu0 %v49
    %401 = vmatpush1.msra.mxu0 %v48
    %402 = vmatprep.subr.mxu0 %v53
    %403 = vmatpush1.msra.mxu0 %v52
    %404 = vmatprep.subr.mxu0 %v57
    %405 = vmatpush1.msra.mxu0 %v56
    %406 = vmatprep.subr.mxu0 %v61
    %407 = vmatpush1.msra.mxu0 %v60
    %408 = vmatprep.subr.mxu0 %v65
    %409 = vmatpush1.msra.mxu0 %v64
    %410 = vmatprep.subr.mxu0 %v69
    %411 = vmatpush1.msra.mxu0 %v68
    %412 = vmatprep.subr.mxu0 %v73
    %413 = vmatpush1.msra.mxu0 %v72
    %414 = vmatprep.subr.mxu0 %v77
    %415 = vmatpush1.msra.mxu0 %v76
    %416 = vmatprep.subr.mxu0 %v81
    %417 = vmatpush1.msra.mxu0 %v80
    %418 = vmatprep.subr.mxu0 %v85
    %419 = vmatpush1.msra.mxu0 %v84
    %420 = vmatprep.subr.mxu0 %v89
    %421 = vmatpush1.msra.mxu0 %v88
    %422 = vmatprep.subr.mxu0 %v93
    %423 = vmatpush1.msra.mxu0 %v92
    %424 = vmatprep.subr.mxu0 %v97
    %425 = vmatpush1.msra.mxu0 %v96
    %426 = vmatprep.subr.mxu0 %v101
    %427 = vmatpush1.msra.mxu0 %v100
    %428 = vmatprep.subr.mxu0 0.0
    %429 = vmatpush1.msra.mxu0 0.0
    %430 = vmatprep.subr.mxu0 0.0
    %431 = vmatpush1.msra.mxu0 0.0
    %432 = vmatprep.subr.mxu0 0.0
    %433 = vmatpush1.msra.mxu0 0.0
    %434 = vmatprep.subr.mxu0 0.0
    %435 = vmatpush1.msra.mxu0 0.0
    %436 = vmatprep.subr.mxu0 0.0
    %437 = vmatpush1.msra.mxu0 0.0
    %438 = vmatprep.subr.mxu0 0.0
    %439 = vmatpush1.msra.mxu0 0.0
    %440 = vmatprep.subr.mxu0 0.0
    %441 = vmatpush1.msra.mxu0 0.0
    %442 = vmatprep.subr.mxu0 0.0
    %443 = vmatpush1.msra.mxu0 0.0
    %444 = vmatprep.subr.mxu0 0.0
    %445 = vmatpush1.msra.mxu0 0.0
    %446 = vmatprep.subr.mxu0 0.0
    %447 = vmatpush1.msra.mxu0 0.0
    %448 = vmatprep.subr.mxu0 0.0
    %449 = vmatpush1.msra.mxu0 0.0
    %450 = vmatprep.subr.mxu0 0.0
    %451 = vmatpush1.msra.mxu0 0.0
    %452 = vmatprep.subr.mxu0 0.0
    %453 = vmatpush1.msra.mxu0 0.0
    %454 = vmatprep.subr.mxu0 0.0
    %455 = vmatpush1.msra.mxu0 0.0
    %456 = vmatprep.subr.mxu0 0.0
    %457 = vmatpush1.msra.mxu0 0.0
    %458 = vmatprep.subr.mxu0 0.0
    %459 = vmatpush1.msra.mxu0 0.0
    %460 = vmatprep.mubr.f32.mxu0 0.0
    %461 = vmatmul.mubr.f32.gmra.mrb[0].mxu0 0.0
    %v462 = vpop.f32.mrb[0].mxu0
    %v463 = vadd.f32 0.0, %v462
    %v464 = vpop.f32.mrb[0].mxu0
    %v465 = vadd.f32 0.0, %v464
    %466 = vdwg.mxu0
    %467 = vmatprep.subr.mxu0 %v43
    %468 = vmatpush1.msra.mxu0 %v42
    %469 = vmatprep.subr.mxu0 %v47
    %470 = vmatpush1.msra.mxu0 %v46
    %471 = vmatprep.subr.mxu0 %v51
    %472 = vmatpush1.msra.mxu0 %v50
    %473 = vmatprep.subr.mxu0 %v55
    %474 = vmatpush1.msra.mxu0 %v54
    %475 = vmatprep.subr.mxu0 %v59
    %476 = vmatpush1.msra.mxu0 %v58
    %477 = vmatprep.subr.mxu0 %v63
    %478 = vmatpush1.msra.mxu0 %v62
    %479 = vmatprep.subr.mxu0 %v67
    %480 = vmatpush1.msra.mxu0 %v66
    %481 = vmatprep.subr.mxu0 %v71
    %482 = vmatpush1.msra.mxu0 %v70
    %483 = vmatprep.subr.mxu0 %v75
    %484 = vmatpush1.msra.mxu0 %v74
    %485 = vmatprep.subr.mxu0 %v79
    %486 = vmatpush1.msra.mxu0 %v78
    %487 = vmatprep.subr.mxu0 %v83
    %488 = vmatpush1.msra.mxu0 %v82
    %489 = vmatprep.subr.mxu0 %v87
    %490 = vmatpush1.msra.mxu0 %v86
    %491 = vmatprep.subr.mxu0 %v91
    %492 = vmatpush1.msra.mxu0 %v90
    %493 = vmatprep.subr.mxu0 %v95
    %494 = vmatpush1.msra.mxu0 %v94
    %495 = vmatprep.subr.mxu0 %v99
    %496 = vmatpush1.msra.mxu0 %v98
    %497 = vmatprep.subr.mxu0 %v103
    %498 = vmatpush1.msra.mxu0 %v102
    %499 = vmatprep.subr.mxu0 0.0
    %500 = vmatpush1.msra.mxu0 0.0
    %501 = vmatprep.subr.mxu0 0.0
    %502 = vmatpush1.msra.mxu0 0.0
    %503 = vmatprep.subr.mxu0 0.0
    %504 = vmatpush1.msra.mxu0 0.0
    %505 = vmatprep.subr.mxu0 0.0
    %506 = vmatpush1.msra.mxu0 0.0
    %507 = vmatprep.subr.mxu0 0.0
    %508 = vmatpush1.msra.mxu0 0.0
    %509 = vmatprep.subr.mxu0 0.0
    %510 = vmatpush1.msra.mxu0 0.0
    %511 = vmatprep.subr.mxu0 0.0
    %512 = vmatpush1.msra.mxu0 0.0
    %513 = vmatprep.subr.mxu0 0.0
    %514 = vmatpush1.msra.mxu0 0.0
    %515 = vmatprep.subr.mxu0 0.0
    %516 = vmatpush1.msra.mxu0 0.0
    %517 = vmatprep.subr.mxu0 0.0
    %518 = vmatpush1.msra.mxu0 0.0
    %519 = vmatprep.subr.mxu0 0.0
    %520 = vmatpush1.msra.mxu0 0.0
    %521 = vmatprep.subr.mxu0 0.0
    %522 = vmatpush1.msra.mxu0 0.0
    %523 = vmatprep.subr.mxu0 0.0
    %524 = vmatpush1.msra.mxu0 0.0
    %525 = vmatprep.subr.mxu0 0.0
    %526 = vmatpush1.msra.mxu0 0.0
    %527 = vmatprep.subr.mxu0 0.0
    %528 = vmatpush1.msra.mxu0 0.0
    %529 = vmatprep.subr.mxu0 0.0
    %530 = vmatpush1.msra.mxu0 0.0
    %531 = vmatprep.mubr.f32.mxu0 0.0
    %532 = vmatmul.mubr.f32.gmra.mrb[0].mxu0 0.0
    %v533 = vpop.f32.mrb[0].mxu0
    %v534 = vadd.f32 0.0, %v533
    %v535 = vpop.f32.mrb[0].mxu0
    %v536 = vadd.f32 0.0, %v535
    %537 = vdwg.mxu0
    %v538 = vadd.f32 %v237, %v463
    %v539 = vadd.f32 %v239, %v465
    %v540 = vadd.f32 %v350, %v534
    %v541 = vadd.f32 %v352, %v536
    %v542 = vxor.u32 %v538, 2147483648
    %v543 = vxor.u32 %v539, 2147483648
    %v544 = vxor.u32 %v540, 2147483648
    %v545 = vmul.f32 %v542, 1.442695
    %v546 = vpow.pop %v545
    %v547 = vmul.f32 %v543, 1.442695
    %v548 = vpow.pop %v547
    %v549 = vmul.f32 %v544, 1.442695
    %v550 = vpow.pop %v549
    %v551 = vadd.f32 %v546, 1.0
    %v552 = vadd.f32 %v548, 1.0
    %v553 = vadd.f32 %v550, 1.0
    %v554 = vrcp.pop %v551
    %v555 = vmul.f32 1.0, %v554
    %v556 = vrcp.pop %v552
    %v557 = vmul.f32 1.0, %v556
    %v558 = vrcp.pop %v553
    %v559 = vmul.f32 1.0, %v558
    %v560 = vtanh.pop %v541
    %v561 = vmul.f32 %v557, 0.0
    %v562 = vmul.f32 %v555, %v560
    %v563 = vadd.f32 %v561, %v562
    %v564 = vtanh.pop %v563
    %v565 = vmul.f32 %v559, %v564
    %v566 = vmul.f32 %v565, %v109
    %567 = vadd.xlane.f32.xlu0 %v566
    %v568 = vpop.xlane.xlu0 %567
    %569 = vmatprep.subr.mxu0 %v41
    %570 = vmatpush1.msra.mxu0 %v40
    %571 = vmatprep.subr.mxu0 %v45
    %572 = vmatpush1.msra.mxu0 %v44
    %573 = vmatprep.subr.mxu0 %v49
    %574 = vmatpush1.msra.mxu0 %v48
    %575 = vmatprep.subr.mxu0 %v53
    %576 = vmatpush1.msra.mxu0 %v52
    %577 = vmatprep.subr.mxu0 %v57
    %578 = vmatpush1.msra.mxu0 %v56
    %579 = vmatprep.subr.mxu0 %v61
    %580 = vmatpush1.msra.mxu0 %v60
    %581 = vmatprep.subr.mxu0 %v65
    %582 = vmatpush1.msra.mxu0 %v64
    %583 = vmatprep.subr.mxu0 %v69
    %584 = vmatpush1.msra.mxu0 %v68
    %585 = vmatprep.subr.mxu0 %v73
    %586 = vmatpush1.msra.mxu0 %v72
    %587 = vmatprep.subr.mxu0 %v77
    %588 = vmatpush1.msra.mxu0 %v76
    %589 = vmatprep.subr.mxu0 %v81
    %590 = vmatpush1.msra.mxu0 %v80
    %591 = vmatprep.subr.mxu0 %v85
    %592 = vmatpush1.msra.mxu0 %v84
    %593 = vmatprep.subr.mxu0 %v89
    %594 = vmatpush1.msra.mxu0 %v88
    %595 = vmatprep.subr.mxu0 %v93
    %596 = vmatpush1.msra.mxu0 %v92
    %597 = vmatprep.subr.mxu0 %v97
    %598 = vmatpush1.msra.mxu0 %v96
    %599 = vmatprep.subr.mxu0 %v101
    %600 = vmatpush1.msra.mxu0 %v100
    %601 = vmatprep.subr.mxu0 0.0
    %602 = vmatpush1.msra.mxu0 0.0
    %603 = vmatprep.subr.mxu0 0.0
    %604 = vmatpush1.msra.mxu0 0.0
    %605 = vmatprep.subr.mxu0 0.0
    %606 = vmatpush1.msra.mxu0 0.0
    %607 = vmatprep.subr.mxu0 0.0
    %608 = vmatpush1.msra.mxu0 0.0
    %609 = vmatprep.subr.mxu0 0.0
    %610 = vmatpush1.msra.mxu0 0.0
    %611 = vmatprep.subr.mxu0 0.0
    %612 = vmatpush1.msra.mxu0 0.0
    %613 = vmatprep.subr.mxu0 0.0
    %614 = vmatpush1.msra.mxu0 0.0
    %615 = vmatprep.subr.mxu0 0.0
    %616 = vmatpush1.msra.mxu0 0.0
    %617 = vmatprep.subr.mxu0 0.0
    %618 = vmatpush1.msra.mxu0 0.0
    %619 = vmatprep.subr.mxu0 0.0
    %620 = vmatpush1.msra.mxu0 0.0
    %621 = vmatprep.subr.mxu0 0.0
    %622 = vmatpush1.msra.mxu0 0.0
    %623 = vmatprep.subr.mxu0 0.0
    %624 = vmatpush1.msra.mxu0 0.0
    %625 = vmatprep.subr.mxu0 0.0
    %626 = vmatpush1.msra.mxu0 0.0
    %627 = vmatprep.subr.mxu0 0.0
    %628 = vmatpush1.msra.mxu0 0.0
    %629 = vmatprep.subr.mxu0 0.0
    %630 = vmatpush1.msra.mxu0 0.0
    %631 = vmatprep.subr.mxu0 0.0
    %632 = vmatpush1.msra.mxu0 0.0
    %633 = vmatprep.mubr.f32.mxu0 0.0
    %634 = vmatmul.mubr.f32.gmra.mrb[0].mxu0 %v565
    %v635 = vpop.f32.mrb[0].mxu0
    %v636 = vadd.f32 0.0, %v635
    %v637 = vpop.f32.mrb[0].mxu0
    %v638 = vadd.f32 0.0, %v637
    %639 = vdwg.mxu0
    %640 = vmatprep.subr.mxu0 %v43
    %641 = vmatpush1.msra.mxu0 %v42
    %642 = vmatprep.subr.mxu0 %v47
    %643 = vmatpush1.msra.mxu0 %v46
    %644 = vmatprep.subr.mxu0 %v51
    %645 = vmatpush1.msra.mxu0 %v50
    %646 = vmatprep.subr.mxu0 %v55
    %647 = vmatpush1.msra.mxu0 %v54
    %648 = vmatprep.subr.mxu0 %v59
    %649 = vmatpush1.msra.mxu0 %v58
    %650 = vmatprep.subr.mxu0 %v63
    %651 = vmatpush1.msra.mxu0 %v62
    %652 = vmatprep.subr.mxu0 %v67
    %653 = vmatpush1.msra.mxu0 %v66
    %654 = vmatprep.subr.mxu0 %v71
    %655 = vmatpush1.msra.mxu0 %v70
    %656 = vmatprep.subr.mxu0 %v75
    %657 = vmatpush1.msra.mxu0 %v74
    %658 = vmatprep.subr.mxu0 %v79
    %659 = vmatpush1.msra.mxu0 %v78
    %660 = vmatprep.subr.mxu0 %v83
    %661 = vmatpush1.msra.mxu0 %v82
    %662 = vmatprep.subr.mxu0 %v87
    %663 = vmatpush1.msra.mxu0 %v86
    %664 = vmatprep.subr.mxu0 %v91
    %665 = vmatpush1.msra.mxu0 %v90
    %666 = vmatprep.subr.mxu0 %v95
    %667 = vmatpush1.msra.mxu0 %v94
    %668 = vmatprep.subr.mxu0 %v99
    %669 = vmatpush1.msra.mxu0 %v98
    %670 = vmatprep.subr.mxu0 %v103
    %671 = vmatpush1.msra.mxu0 %v102
    %672 = vmatprep.subr.mxu0 0.0
    %673 = vmatpush1.msra.mxu0 0.0
    %674 = vmatprep.subr.mxu0 0.0
    %675 = vmatpush1.msra.mxu0 0.0
    %676 = vmatprep.subr.mxu0 0.0
    %677 = vmatpush1.msra.mxu0 0.0
    %678 = vmatprep.subr.mxu0 0.0
    %679 = vmatpush1.msra.mxu0 0.0
    %680 = vmatprep.subr.mxu0 0.0
    %681 = vmatpush1.msra.mxu0 0.0
    %682 = vmatprep.subr.mxu0 0.0
    %683 = vmatpush1.msra.mxu0 0.0
    %684 = vmatprep.subr.mxu0 0.0
    %685 = vmatpush1.msra.mxu0 0.0
    %686 = vmatprep.subr.mxu0 0.0
    %687 = vmatpush1.msra.mxu0 0.0
    %688 = vmatprep.subr.mxu0 0.0
    %689 = vmatpush1.msra.mxu0 0.0
    %690 = vmatprep.subr.mxu0 0.0
    %691 = vmatpush1.msra.mxu0 0.0
    %692 = vmatprep.subr.mxu0 0.0
    %693 = vmatpush1.msra.mxu0 0.0
    %694 = vmatprep.subr.mxu0 0.0
    %695 = vmatpush1.msra.mxu0 0.0
    %696 = vmatprep.subr.mxu0 0.0
    %697 = vmatpush1.msra.mxu0 0.0
    %698 = vmatprep.subr.mxu0 0.0
    %699 = vmatpush1.msra.mxu0 0.0
    %700 = vmatprep.subr.mxu0 0.0
    %701 = vmatpush1.msra.mxu0 0.0
    %702 = vmatprep.subr.mxu0 0.0
    %703 = vmatpush1.msra.mxu0 0.0
    %704 = vmatprep.mubr.f32.mxu0 0.0
    %705 = vmatmul.mubr.f32.gmra.mrb[0].mxu0 %v565
    %v706 = vpop.f32.mrb[0].mxu0
    %v707 = vadd.f32 0.0, %v706
    %v708 = vpop.f32.mrb[0].mxu0
    %v709 = vadd.f32 0.0, %v708
    %710 = vdwg.mxu0
    %v711 = vadd.f32 %v243, %v636
    %v712 = vadd.f32 %v245, %v638
    %v713 = vadd.f32 %v356, %v707
    %v714 = vadd.f32 %v358, %v709
    %v715 = vxor.u32 %v711, 2147483648
    %v716 = vxor.u32 %v712, 2147483648
    %v717 = vxor.u32 %v713, 2147483648
    %v718 = vmul.f32 %v715, 1.442695
    %v719 = vpow.pop %v718
    %v720 = vmul.f32 %v716, 1.442695
    %v721 = vpow.pop %v720
    %v722 = vmul.f32 %v717, 1.442695
    %v723 = vpow.pop %v722
    %v724 = vadd.f32 %v719, 1.0
    %v725 = vadd.f32 %v721, 1.0
    %v726 = vadd.f32 %v723, 1.0
    %v727 = vrcp.pop %v724
    %v728 = vmul.f32 1.0, %v727
    %v729 = vrcp.pop %v725
    %v730 = vmul.f32 1.0, %v729
    %v731 = vrcp.pop %v726
    %v732 = vmul.f32 1.0, %v731
    %v733 = vtanh.pop %v714
    %v734 = vmul.f32 %v730, %v563
    %v735 = vmul.f32 %v728, %v733
    %v736 = vadd.f32 %v734, %v735
    %v737 = vtanh.pop %v736
    %v738 = vmul.f32 %v732, %v737
    %v739 = vmul.f32 %v738, %v109
    %740 = vadd.xlane.f32.xlu0 %v739
    %v741 = vpop.xlane.xlu0 %740
    %742 = vmatprep.subr.mxu0 %v41
    %743 = vmatpush1.msra.mxu0 %v40
    %744 = vmatprep.subr.mxu0 %v45
    %745 = vmatpush1.msra.mxu0 %v44
    %746 = vmatprep.subr.mxu0 %v49
    %747 = vmatpush1.msra.mxu0 %v48
    %748 = vmatprep.subr.mxu0 %v53
    %749 = vmatpush1.msra.mxu0 %v52
    %750 = vmatprep.subr.mxu0 %v57
    %751 = vmatpush1.msra.mxu0 %v56
    %752 = vmatprep.subr.mxu0 %v61
    %753 = vmatpush1.msra.mxu0 %v60
    %754 = vmatprep.subr.mxu0 %v65
    %755 = vmatpush1.msra.mxu0 %v64
    %756 = vmatprep.subr.mxu0 %v69
    %757 = vmatpush1.msra.mxu0 %v68
    %758 = vmatprep.subr.mxu0 %v73
    %759 = vmatpush1.msra.mxu0 %v72
    %760 = vmatprep.subr.mxu0 %v77
    %761 = vmatpush1.msra.mxu0 %v76
    %762 = vmatprep.subr.mxu0 %v81
    %763 = vmatpush1.msra.mxu0 %v80
    %764 = vmatprep.subr.mxu0 %v85
    %765 = vmatpush1.msra.mxu0 %v84
    %766 = vmatprep.subr.mxu0 %v89
    %767 = vmatpush1.msra.mxu0 %v88
    %768 = vmatprep.subr.mxu0 %v93
    %769 = vmatpush1.msra.mxu0 %v92
    %770 = vmatprep.subr.mxu0 %v97
    %771 = vmatpush1.msra.mxu0 %v96
    %772 = vmatprep.subr.mxu0 %v101
    %773 = vmatpush1.msra.mxu0 %v100
    %774 = vmatprep.subr.mxu0 0.0
    %775 = vmatpush1.msra.mxu0 0.0
    %776 = vmatprep.subr.mxu0 0.0
    %777 = vmatpush1.msra.mxu0 0.0
    %778 = vmatprep.subr.mxu0 0.0
    %779 = vmatpush1.msra.mxu0 0.0
    %780 = vmatprep.subr.mxu0 0.0
    %781 = vmatpush1.msra.mxu0 0.0
    %782 = vmatprep.subr.mxu0 0.0
    %783 = vmatpush1.msra.mxu0 0.0
    %784 = vmatprep.subr.mxu0 0.0
    %785 = vmatpush1.msra.mxu0 0.0
    %786 = vmatprep.subr.mxu0 0.0
    %787 = vmatpush1.msra.mxu0 0.0
    %788 = vmatprep.subr.mxu0 0.0
    %789 = vmatpush1.msra.mxu0 0.0
    %790 = vmatprep.subr.mxu0 0.0
    %791 = vmatpush1.msra.mxu0 0.0
    %792 = vmatprep.subr.mxu0 0.0
    %793 = vmatpush1.msra.mxu0 0.0
    %794 = vmatprep.subr.mxu0 0.0
    %795 = vmatpush1.msra.mxu0 0.0
    %796 = vmatprep.subr.mxu0 0.0
    %797 = vmatpush1.msra.mxu0 0.0
    %798 = vmatprep.subr.mxu0 0.0
    %799 = vmatpush1.msra.mxu0 0.0
    %800 = vmatprep.subr.mxu0 0.0
    %801 = vmatpush1.msra.mxu0 0.0
    %802 = vmatprep.subr.mxu0 0.0
    %803 = vmatpush1.msra.mxu0 0.0
    %804 = vmatprep.subr.mxu0 0.0
    %805 = vmatpush1.msra.mxu0 0.0
    %806 = vmatprep.mubr.f32.mxu0 0.0
    %807 = vmatmul.mubr.f32.gmra.mrb[0].mxu0 %v738
    %v808 = vpop.f32.mrb[0].mxu0
    %v809 = vadd.f32 0.0, %v808
    %v810 = vpop.f32.mrb[0].mxu0
    %v811 = vadd.f32 0.0, %v810
    %812 = vdwg.mxu0
    %813 = vmatprep.subr.mxu0 %v43
    %814 = vmatpush1.msra.mxu0 %v42
    %815 = vmatprep.subr.mxu0 %v47
    %816 = vmatpush1.msra.mxu0 %v46
    %817 = vmatprep.subr.mxu0 %v51
    %818 = vmatpush1.msra.mxu0 %v50
    %819 = vmatprep.subr.mxu0 %v55
    %820 = vmatpush1.msra.mxu0 %v54
    %821 = vmatprep.subr.mxu0 %v59
    %822 = vmatpush1.msra.mxu0 %v58
    %823 = vmatprep.subr.mxu0 %v63
    %824 = vmatpush1.msra.mxu0 %v62
    %825 = vmatprep.subr.mxu0 %v67
    %826 = vmatpush1.msra.mxu0 %v66
    %827 = vmatprep.subr.mxu0 %v71
    %828 = vmatpush1.msra.mxu0 %v70
    %829 = vmatprep.subr.mxu0 %v75
    %830 = vmatpush1.msra.mxu0 %v74
    %831 = vmatprep.subr.mxu0 %v79
    %832 = vmatpush1.msra.mxu0 %v78
    %833 = vmatprep.subr.mxu0 %v83
    %834 = vmatpush1.msra.mxu0 %v82
    %835 = vmatprep.subr.mxu0 %v87
    %836 = vmatpush1.msra.mxu0 %v86
    %837 = vmatprep.subr.mxu0 %v91
    %838 = vmatpush1.msra.mxu0 %v90
    %839 = vmatprep.subr.mxu0 %v95
    %840 = vmatpush1.msra.mxu0 %v94
    %841 = vmatprep.subr.mxu0 %v99
    %842 = vmatpush1.msra.mxu0 %v98
    %843 = vmatprep.subr.mxu0 %v103
    %844 = vmatpush1.msra.mxu0 %v102
    %845 = vmatprep.subr.mxu0 0.0
    %846 = vmatpush1.msra.mxu0 0.0
    %847 = vmatprep.subr.mxu0 0.0
    %848 = vmatpush1.msra.mxu0 0.0
    %849 = vmatprep.subr.mxu0 0.0
    %850 = vmatpush1.msra.mxu0 0.0
    %851 = vmatprep.subr.mxu0 0.0
    %852 = vmatpush1.msra.mxu0 0.0
    %853 = vmatprep.subr.mxu0 0.0
    %854 = vmatpush1.msra.mxu0 0.0
    %855 = vmatprep.subr.mxu0 0.0
    %856 = vmatpush1.msra.mxu0 0.0
    %857 = vmatprep.subr.mxu0 0.0
    %858 = vmatpush1.msra.mxu0 0.0
    %859 = vmatprep.subr.mxu0 0.0
    %860 = vmatpush1.msra.mxu0 0.0
    %861 = vmatprep.subr.mxu0 0.0
    %862 = vmatpush1.msra.mxu0 0.0
    %863 = vmatprep.subr.mxu0 0.0
    %864 = vmatpush1.msra.mxu0 0.0
    %865 = vmatprep.subr.mxu0 0.0
    %866 = vmatpush1.msra.mxu0 0.0
    %867 = vmatprep.subr.mxu0 0.0
    %868 = vmatpush1.msra.mxu0 0.0
    %869 = vmatprep.subr.mxu0 0.0
    %870 = vmatpush1.msra.mxu0 0.0
    %871 = vmatprep.subr.mxu0 0.0
    %872 = vmatpush1.msra.mxu0 0.0
    %873 = vmatprep.subr.mxu0 0.0
    %874 = vmatpush1.msra.mxu0 0.0
    %875 = vmatprep.subr.mxu0 0.0
    %876 = vmatpush1.msra.mxu0 0.0
    %877 = vmatprep.mubr.f32.mxu0 0.0
    %878 = vmatmul.mubr.f32.gmra.mrb[0].mxu0 %v738
    %v879 = vpop.f32.mrb[0].mxu0
    %v880 = vadd.f32 0.0, %v879
    %v881 = vpop.f32.mrb[0].mxu0
    %v882 = vadd.f32 0.0, %v881
    %883 = vdwg.mxu0
    %v884 = vadd.f32 %v249, %v809
    %v885 = vadd.f32 %v251, %v811
    %v886 = vadd.f32 %v362, %v880
    %v887 = vadd.f32 %v364, %v882
    %v888 = vxor.u32 %v884, 2147483648
    %v889 = vxor.u32 %v885, 2147483648
    %v890 = vxor.u32 %v886, 2147483648
    %v891 = vmul.f32 %v888, 1.442695
    %v892 = vpow.pop %v891
    %v893 = vmul.f32 %v889, 1.442695
    %v894 = vpow.pop %v893
    %v895 = vmul.f32 %v890, 1.442695
    %v896 = vpow.pop %v895
    %v897 = vadd.f32 %v892, 1.0
    %v898 = vadd.f32 %v894, 1.0
    %v899 = vadd.f32 %v896, 1.0
    %v900 = vrcp.pop %v897
    %v901 = vmul.f32 1.0, %v900
    %v902 = vrcp.pop %v898
    %v903 = vmul.f32 1.0, %v902
    %v904 = vrcp.pop %v899
    %v905 = vmul.f32 1.0, %v904
    %v906 = vtanh.pop %v887
    %v907 = vmul.f32 %v903, %v736
    %v908 = vmul.f32 %v901, %v906
    %v909 = vadd.f32 %v907, %v908
    %v910 = vtanh.pop %v909
    %v911 = vmul.f32 %v905, %v910
    %v912 = vmul.f32 %v911, %v109
    %913 = vadd.xlane.f32.xlu0 %v912
    %v914 = vpop.xlane.xlu0 %913
    %915 = vmatprep.subr.mxu0 %v41
    %916 = vmatpush1.msra.mxu0 %v40
    %917 = vmatprep.subr.mxu0 %v45
    %918 = vmatpush1.msra.mxu0 %v44
    %919 = vmatprep.subr.mxu0 %v49
    %920 = vmatpush1.msra.mxu0 %v48
    %921 = vmatprep.subr.mxu0 %v53
    %922 = vmatpush1.msra.mxu0 %v52
    %923 = vmatprep.subr.mxu0 %v57
    %924 = vmatpush1.msra.mxu0 %v56
    %925 = vmatprep.subr.mxu0 %v61
    %926 = vmatpush1.msra.mxu0 %v60
    %927 = vmatprep.subr.mxu0 %v65
    %928 = vmatpush1.msra.mxu0 %v64
    %929 = vmatprep.subr.mxu0 %v69
    %930 = vmatpush1.msra.mxu0 %v68
    %931 = vmatprep.subr.mxu0 %v73
    %932 = vmatpush1.msra.mxu0 %v72
    %933 = vmatprep.subr.mxu0 %v77
    %934 = vmatpush1.msra.mxu0 %v76
    %935 = vmatprep.subr.mxu0 %v81
    %936 = vmatpush1.msra.mxu0 %v80
    %937 = vmatprep.subr.mxu0 %v85
    %938 = vmatpush1.msra.mxu0 %v84
    %939 = vmatprep.subr.mxu0 %v89
    %940 = vmatpush1.msra.mxu0 %v88
    %941 = vmatprep.subr.mxu0 %v93
    %942 = vmatpush1.msra.mxu0 %v92
    %943 = vmatprep.subr.mxu0 %v97
    %944 = vmatpush1.msra.mxu0 %v96
    %945 = vmatprep.subr.mxu0 %v101
    %946 = vmatpush1.msra.mxu0 %v100
    %947 = vmatprep.subr.mxu0 0.0
    %948 = vmatpush1.msra.mxu0 0.0
    %949 = vmatprep.subr.mxu0 0.0
    %950 = vmatpush1.msra.mxu0 0.0
    %951 = vmatprep.subr.mxu0 0.0
    %952 = vmatpush1.msra.mxu0 0.0
    %953 = vmatprep.subr.mxu0 0.0
    %954 = vmatpush1.msra.mxu0 0.0
    %955 = vmatprep.subr.mxu0 0.0
    %956 = vmatpush1.msra.mxu0 0.0
    %957 = vmatprep.subr.mxu0 0.0
    %958 = vmatpush1.msra.mxu0 0.0
    %959 = vmatprep.subr.mxu0 0.0
    %960 = vmatpush1.msra.mxu0 0.0
    %961 = vmatprep.subr.mxu0 0.0
    %962 = vmatpush1.msra.mxu0 0.0
    %963 = vmatprep.subr.mxu0 0.0
    %964 = vmatpush1.msra.mxu0 0.0
    %965 = vmatprep.subr.mxu0 0.0
    %966 = vmatpush1.msra.mxu0 0.0
    %967 = vmatprep.subr.mxu0 0.0
    %968 = vmatpush1.msra.mxu0 0.0
    %969 = vmatprep.subr.mxu0 0.0
    %970 = vmatpush1.msra.mxu0 0.0
    %971 = vmatprep.subr.mxu0 0.0
    %972 = vmatpush1.msra.mxu0 0.0
    %973 = vmatprep.subr.mxu0 0.0
    %974 = vmatpush1.msra.mxu0 0.0
    %975 = vmatprep.subr.mxu0 0.0
    %976 = vmatpush1.msra.mxu0 0.0
    %977 = vmatprep.subr.mxu0 0.0
    %978 = vmatpush1.msra.mxu0 0.0
    %979 = vmatprep.mubr.f32.mxu0 0.0
    %980 = vmatmul.mubr.f32.gmra.mrb[0].mxu0 %v911
    %v981 = vpop.f32.mrb[0].mxu0
    %v982 = vadd.f32 0.0, %v981
    %v983 = vpop.f32.mrb[0].mxu0
    %v984 = vadd.f32 0.0, %v983
    %985 = vdwg.mxu0
    %986 = vmatprep.subr.mxu0 %v43
    %987 = vmatpush1.msra.mxu0 %v42
    %988 = vmatprep.subr.mxu0 %v47
    %989 = vmatpush1.msra.mxu0 %v46
    %990 = vmatprep.subr.mxu0 %v51
    %991 = vmatpush1.msra.mxu0 %v50
    %992 = vmatprep.subr.mxu0 %v55
    %993 = vmatpush1.msra.mxu0 %v54
    %994 = vmatprep.subr.mxu0 %v59
    %995 = vmatpush1.msra.mxu0 %v58
    %996 = vmatprep.subr.mxu0 %v63
    %997 = vmatpush1.msra.mxu0 %v62
    %998 = vmatprep.subr.mxu0 %v67
    %999 = vmatpush1.msra.mxu0 %v66
    %1000 = vmatprep.subr.mxu0 %v71
    %1001 = vmatpush1.msra.mxu0 %v70
    %1002 = vmatprep.subr.mxu0 %v75
    %1003 = vmatpush1.msra.mxu0 %v74
    %1004 = vmatprep.subr.mxu0 %v79
    %1005 = vmatpush1.msra.mxu0 %v78
    %1006 = vmatprep.subr.mxu0 %v83
    %1007 = vmatpush1.msra.mxu0 %v82
    %1008 = vmatprep.subr.mxu0 %v87
    %1009 = vmatpush1.msra.mxu0 %v86
    %1010 = vmatprep.subr.mxu0 %v91
    %1011 = vmatpush1.msra.mxu0 %v90
    %1012 = vmatprep.subr.mxu0 %v95
    %1013 = vmatpush1.msra.mxu0 %v94
    %1014 = vmatprep.subr.mxu0 %v99
    %1015 = vmatpush1.msra.mxu0 %v98
    %1016 = vmatprep.subr.mxu0 %v103
    %1017 = vmatpush1.msra.mxu0 %v102
    %1018 = vmatprep.subr.mxu0 0.0
    %1019 = vmatpush1.msra.mxu0 0.0
    %1020 = vmatprep.subr.mxu0 0.0
    %1021 = vmatpush1.msra.mxu0 0.0
    %1022 = vmatprep.subr.mxu0 0.0
    %1023 = vmatpush1.msra.mxu0 0.0
    %1024 = vmatprep.subr.mxu0 0.0
    %1025 = vmatpush1.msra.mxu0 0.0
    %1026 = vmatprep.subr.mxu0 0.0
    %1027 = vmatpush1.msra.mxu0 0.0
    %1028 = vmatprep.subr.mxu0 0.0
    %1029 = vmatpush1.msra.mxu0 0.0
    %1030 = vmatprep.subr.mxu0 0.0
    %1031 = vmatpush1.msra.mxu0 0.0
    %1032 = vmatprep.subr.mxu0 0.0
    %1033 = vmatpush1.msra.mxu0 0.0
    %1034 = vmatprep.subr.mxu0 0.0
    %1035 = vmatpush1.msra.mxu0 0.0
    %1036 = vmatprep.subr.mxu0 0.0
    %1037 = vmatpush1.msra.mxu0 0.0
    %1038 = vmatprep.subr.mxu0 0.0
    %1039 = vmatpush1.msra.mxu0 0.0
    %1040 = vmatprep.subr.mxu0 0.0
    %1041 = vmatpush1.msra.mxu0 0.0
    %1042 = vmatprep.subr.mxu0 0.0
    %1043 = vmatpush1.msra.mxu0 0.0
    %1044 = vmatprep.subr.mxu0 0.0
    %1045 = vmatpush1.msra.mxu0 0.0
    %1046 = vmatprep.subr.mxu0 0.0
    %1047 = vmatpush1.msra.mxu0 0.0
    %1048 = vmatprep.subr.mxu0 0.0
    %1049 = vmatpush1.msra.mxu0 0.0
    %1050 = vmatprep.mubr.f32.mxu0 0.0
    %1051 = vmatmul.mubr.f32.gmra.mrb[0].mxu0 %v911
    %v1052 = vpop.f32.mrb[0].mxu0
    %v1053 = vadd.f32 0.0, %v1052
    %v1054 = vpop.f32.mrb[0].mxu0
    %v1055 = vadd.f32 0.0, %v1054
    %1056 = vdwg.mxu0
    %v1057 = vadd.f32 %v255, %v982
    %v1058 = vadd.f32 %v257, %v984
    %v1059 = vadd.f32 %v368, %v1053
    %v1060 = vadd.f32 %v370, %v1055
    %v1061 = vxor.u32 %v1057, 2147483648
    %v1062 = vxor.u32 %v1058, 2147483648
    %v1063 = vxor.u32 %v1059, 2147483648
    %v1064 = vmul.f32 %v1061, 1.442695
    %v1065 = vpow.pop %v1064
    %v1066 = vmul.f32 %v1062, 1.442695
    %v1067 = vpow.pop %v1066
    %v1068 = vmul.f32 %v1063, 1.442695
    %v1069 = vpow.pop %v1068
    %v1070 = vadd.f32 %v1065, 1.0
    %v1071 = vadd.f32 %v1067, 1.0
    %v1072 = vadd.f32 %v1069, 1.0
    %v1073 = vrcp.pop %v1070
    %v1074 = vmul.f32 1.0, %v1073
    %v1075 = vrcp.pop %v1071
    %v1076 = vmul.f32 1.0, %v1075
    %v1077 = vrcp.pop %v1072
    %v1078 = vmul.f32 1.0, %v1077
    %v1079 = vtanh.pop %v1060
    %v1080 = vmul.f32 %v1076, %v909
    %v1081 = vmul.f32 %v1074, %v1079
    %v1082 = vadd.f32 %v1080, %v1081
    %v1083 = vtanh.pop %v1082
    %v1084 = vmul.f32 %v1078, %v1083
    %v1085 = vmul.f32 %v1084, %v109
    %1086 = vadd.xlane.f32.xlu0 %v1085
    %v1087 = vpop.xlane.xlu0 %1086
    %1088 = vmatprep.subr.mxu0 %v41
    %1089 = vmatpush1.msra.mxu0 %v40
    %1090 = vmatprep.subr.mxu0 %v45
    %1091 = vmatpush1.msra.mxu0 %v44
    %1092 = vmatprep.subr.mxu0 %v49
    %1093 = vmatpush1.msra.mxu0 %v48
    %1094 = vmatprep.subr.mxu0 %v53
    %1095 = vmatpush1.msra.mxu0 %v52
    %1096 = vmatprep.subr.mxu0 %v57
    %1097 = vmatpush1.msra.mxu0 %v56
    %1098 = vmatprep.subr.mxu0 %v61
    %1099 = vmatpush1.msra.mxu0 %v60
    %1100 = vmatprep.subr.mxu0 %v65
    %1101 = vmatpush1.msra.mxu0 %v64
    %1102 = vmatprep.subr.mxu0 %v69
    %1103 = vmatpush1.msra.mxu0 %v68
    %1104 = vmatprep.subr.mxu0 %v73
    %1105 = vmatpush1.msra.mxu0 %v72
    %1106 = vmatprep.subr.mxu0 %v77
    %1107 = vmatpush1.msra.mxu0 %v76
    %1108 = vmatprep.subr.mxu0 %v81
    %1109 = vmatpush1.msra.mxu0 %v80
    %1110 = vmatprep.subr.mxu0 %v85
    %1111 = vmatpush1.msra.mxu0 %v84
    %1112 = vmatprep.subr.mxu0 %v89
    %1113 = vmatpush1.msra.mxu0 %v88
    %1114 = vmatprep.subr.mxu0 %v93
    %1115 = vmatpush1.msra.mxu0 %v92
    %1116 = vmatprep.subr.mxu0 %v97
    %1117 = vmatpush1.msra.mxu0 %v96
    %1118 = vmatprep.subr.mxu0 %v101
    %1119 = vmatpush1.msra.mxu0 %v100
    %1120 = vmatprep.subr.mxu0 0.0
    %1121 = vmatpush1.msra.mxu0 0.0
    %1122 = vmatprep.subr.mxu0 0.0
    %1123 = vmatpush1.msra.mxu0 0.0
    %1124 = vmatprep.subr.mxu0 0.0
    %1125 = vmatpush1.msra.mxu0 0.0
    %1126 = vmatprep.subr.mxu0 0.0
    %1127 = vmatpush1.msra.mxu0 0.0
    %1128 = vmatprep.subr.mxu0 0.0
    %1129 = vmatpush1.msra.mxu0 0.0
    %1130 = vmatprep.subr.mxu0 0.0
    %1131 = vmatpush1.msra.mxu0 0.0
    %1132 = vmatprep.subr.mxu0 0.0
    %1133 = vmatpush1.msra.mxu0 0.0
    %1134 = vmatprep.subr.mxu0 0.0
    %1135 = vmatpush1.msra.mxu0 0.0
    %1136 = vmatprep.subr.mxu0 0.0
    %1137 = vmatpush1.msra.mxu0 0.0
    %1138 = vmatprep.subr.mxu0 0.0
    %1139 = vmatpush1.msra.mxu0 0.0
    %1140 = vmatprep.subr.mxu0 0.0
    %1141 = vmatpush1.msra.mxu0 0.0
    %1142 = vmatprep.subr.mxu0 0.0
    %1143 = vmatpush1.msra.mxu0 0.0
    %1144 = vmatprep.subr.mxu0 0.0
    %1145 = vmatpush1.msra.mxu0 0.0
    %1146 = vmatprep.subr.mxu0 0.0
    %1147 = vmatpush1.msra.mxu0 0.0
    %1148 = vmatprep.subr.mxu0 0.0
    %1149 = vmatpush1.msra.mxu0 0.0
    %1150 = vmatprep.subr.mxu0 0.0
    %1151 = vmatpush1.msra.mxu0 0.0
    %1152 = vmatprep.mubr.f32.mxu0 0.0
    %1153 = vmatmul.mubr.f32.gmra.mrb[0].mxu0 %v1084
    %v1154 = vpop.f32.mrb[0].mxu0
    %v1155 = vadd.f32 0.0, %v1154
    %v1156 = vpop.f32.mrb[0].mxu0
    %v1157 = vadd.f32 0.0, %v1156
    %1158 = vdwg.mxu0
    %1159 = vmatprep.subr.mxu0 %v43
    %1160 = vmatpush1.msra.mxu0 %v42
    %1161 = vmatprep.subr.mxu0 %v47
    %1162 = vmatpush1.msra.mxu0 %v46
    %1163 = vmatprep.subr.mxu0 %v51
    %1164 = vmatpush1.msra.mxu0 %v50
    %1165 = vmatprep.subr.mxu0 %v55
    %1166 = vmatpush1.msra.mxu0 %v54
    %1167 = vmatprep.subr.mxu0 %v59
    %1168 = vmatpush1.msra.mxu0 %v58
    %1169 = vmatprep.subr.mxu0 %v63
    %1170 = vmatpush1.msra.mxu0 %v62
    %1171 = vmatprep.subr.mxu0 %v67
    %1172 = vmatpush1.msra.mxu0 %v66
    %1173 = vmatprep.subr.mxu0 %v71
    %1174 = vmatpush1.msra.mxu0 %v70
    %1175 = vmatprep.subr.mxu0 %v75
    %1176 = vmatpush1.msra.mxu0 %v74
    %1177 = vmatprep.subr.mxu0 %v79
    %1178 = vmatpush1.msra.mxu0 %v78
    %1179 = vmatprep.subr.mxu0 %v83
    %1180 = vmatpush1.msra.mxu0 %v82
    %1181 = vmatprep.subr.mxu0 %v87
    %1182 = vmatpush1.msra.mxu0 %v86
    %1183 = vmatprep.subr.mxu0 %v91
    %1184 = vmatpush1.msra.mxu0 %v90
    %1185 = vmatprep.subr.mxu0 %v95
    %1186 = vmatpush1.msra.mxu0 %v94
    %1187 = vmatprep.subr.mxu0 %v99
    %1188 = vmatpush1.msra.mxu0 %v98
    %1189 = vmatprep.subr.mxu0 %v103
    %1190 = vmatpush1.msra.mxu0 %v102
    %1191 = vmatprep.subr.mxu0 0.0
    %1192 = vmatpush1.msra.mxu0 0.0
    %1193 = vmatprep.subr.mxu0 0.0
    %1194 = vmatpush1.msra.mxu0 0.0
    %1195 = vmatprep.subr.mxu0 0.0
    %1196 = vmatpush1.msra.mxu0 0.0
    %1197 = vmatprep.subr.mxu0 0.0
    %1198 = vmatpush1.msra.mxu0 0.0
    %1199 = vmatprep.subr.mxu0 0.0
    %1200 = vmatpush1.msra.mxu0 0.0
    %1201 = vmatprep.subr.mxu0 0.0
    %1202 = vmatpush1.msra.mxu0 0.0
    %1203 = vmatprep.subr.mxu0 0.0
    %1204 = vmatpush1.msra.mxu0 0.0
    %1205 = vmatprep.subr.mxu0 0.0
    %1206 = vmatpush1.msra.mxu0 0.0
    %1207 = vmatprep.subr.mxu0 0.0
    %1208 = vmatpush1.msra.mxu0 0.0
    %1209 = vmatprep.subr.mxu0 0.0
    %1210 = vmatpush1.msra.mxu0 0.0
    %1211 = vmatprep.subr.mxu0 0.0
    %1212 = vmatpush1.msra.mxu0 0.0
    %1213 = vmatprep.subr.mxu0 0.0
    %1214 = vmatpush1.msra.mxu0 0.0
    %1215 = vmatprep.subr.mxu0 0.0
    %1216 = vmatpush1.msra.mxu0 0.0
    %1217 = vmatprep.subr.mxu0 0.0
    %1218 = vmatpush1.msra.mxu0 0.0
    %1219 = vmatprep.subr.mxu0 0.0
    %1220 = vmatpush1.msra.mxu0 0.0
    %1221 = vmatprep.subr.mxu0 0.0
    %1222 = vmatpush1.msra.mxu0 0.0
    %1223 = vmatprep.mubr.f32.mxu0 0.0
    %1224 = vmatmul.mubr.f32.gmra.mrb[0].mxu0 %v1084
    %v1225 = vpop.f32.mrb[0].mxu0
    %v1226 = vadd.f32 0.0, %v1225
    %v1227 = vpop.f32.mrb[0].mxu0
    %v1228 = vadd.f32 0.0, %v1227
    %1229 = vdwg.mxu0
    %v1230 = vadd.f32 %v261, %v1155
    %v1231 = vadd.f32 %v263, %v1157
    %v1232 = vadd.f32 %v374, %v1226
    %v1233 = vadd.f32 %v376, %v1228
    %v1234 = vxor.u32 %v1230, 2147483648
    %v1235 = vxor.u32 %v1231, 2147483648
    %v1236 = vxor.u32 %v1232, 2147483648
    %v1237 = vmul.f32 %v1234, 1.442695
    %v1238 = vpow.pop %v1237
    %v1239 = vmul.f32 %v1235, 1.442695
    %v1240 = vpow.pop %v1239
    %v1241 = vmul.f32 %v1236, 1.442695
    %v1242 = vpow.pop %v1241
    %v1243 = vadd.f32 %v1238, 1.0
    %v1244 = vadd.f32 %v1240, 1.0
    %v1245 = vadd.f32 %v1242, 1.0
    %v1246 = vrcp.pop %v1243
    %v1247 = vmul.f32 1.0, %v1246
    %v1248 = vrcp.pop %v1244
    %v1249 = vmul.f32 1.0, %v1248
    %v1250 = vrcp.pop %v1245
    %v1251 = vmul.f32 1.0, %v1250
    %v1252 = vtanh.pop %v1233
    %v1253 = vmul.f32 %v1249, %v1082
    %v1254 = vmul.f32 %v1247, %v1252
    %v1255 = vadd.f32 %v1253, %v1254
    %v1256 = vtanh.pop %v1255
    %v1257 = vmul.f32 %v1251, %v1256
    %v1258 = vmul.f32 %v1257, %v109
    %1259 = vadd.xlane.f32.xlu0 %v1258
    %v1260 = vpop.xlane.xlu0 %1259
    %1261 = vmatprep.subr.mxu0 %v41
    %1262 = vmatpush1.msra.mxu0 %v40
    %1263 = vmatprep.subr.mxu0 %v45
    %1264 = vmatpush1.msra.mxu0 %v44
    %1265 = vmatprep.subr.mxu0 %v49
    %1266 = vmatpush1.msra.mxu0 %v48
    %1267 = vmatprep.subr.mxu0 %v53
    %1268 = vmatpush1.msra.mxu0 %v52
    %1269 = vmatprep.subr.mxu0 %v57
    %1270 = vmatpush1.msra.mxu0 %v56
    %1271 = vmatprep.subr.mxu0 %v61
    %1272 = vmatpush1.msra.mxu0 %v60
    %1273 = vmatprep.subr.mxu0 %v65
    %1274 = vmatpush1.msra.mxu0 %v64
    %1275 = vmatprep.subr.mxu0 %v69
    %1276 = vmatpush1.msra.mxu0 %v68
    %1277 = vmatprep.subr.mxu0 %v73
    %1278 = vmatpush1.msra.mxu0 %v72
    %1279 = vmatprep.subr.mxu0 %v77
    %1280 = vmatpush1.msra.mxu0 %v76
    %1281 = vmatprep.subr.mxu0 %v81
    %1282 = vmatpush1.msra.mxu0 %v80
    %1283 = vmatprep.subr.mxu0 %v85
    %1284 = vmatpush1.msra.mxu0 %v84
    %1285 = vmatprep.subr.mxu0 %v89
    %1286 = vmatpush1.msra.mxu0 %v88
    %1287 = vmatprep.subr.mxu0 %v93
    %1288 = vmatpush1.msra.mxu0 %v92
    %1289 = vmatprep.subr.mxu0 %v97
    %1290 = vmatpush1.msra.mxu0 %v96
    %1291 = vmatprep.subr.mxu0 %v101
    %1292 = vmatpush1.msra.mxu0 %v100
    %1293 = vmatprep.subr.mxu0 0.0
    %1294 = vmatpush1.msra.mxu0 0.0
    %1295 = vmatprep.subr.mxu0 0.0
    %1296 = vmatpush1.msra.mxu0 0.0
    %1297 = vmatprep.subr.mxu0 0.0
    %1298 = vmatpush1.msra.mxu0 0.0
    %1299 = vmatprep.subr.mxu0 0.0
    %1300 = vmatpush1.msra.mxu0 0.0
    %1301 = vmatprep.subr.mxu0 0.0
    %1302 = vmatpush1.msra.mxu0 0.0
    %1303 = vmatprep.subr.mxu0 0.0
    %1304 = vmatpush1.msra.mxu0 0.0
    %1305 = vmatprep.subr.mxu0 0.0
    %1306 = vmatpush1.msra.mxu0 0.0
    %1307 = vmatprep.subr.mxu0 0.0
    %1308 = vmatpush1.msra.mxu0 0.0
    %1309 = vmatprep.subr.mxu0 0.0
    %1310 = vmatpush1.msra.mxu0 0.0
    %1311 = vmatprep.subr.mxu0 0.0
    %1312 = vmatpush1.msra.mxu0 0.0
    %1313 = vmatprep.subr.mxu0 0.0
    %1314 = vmatpush1.msra.mxu0 0.0
    %1315 = vmatprep.subr.mxu0 0.0
    %1316 = vmatpush1.msra.mxu0 0.0
    %1317 = vmatprep.subr.mxu0 0.0
    %1318 = vmatpush1.msra.mxu0 0.0
    %1319 = vmatprep.subr.mxu0 0.0
    %1320 = vmatpush1.msra.mxu0 0.0
    %1321 = vmatprep.subr.mxu0 0.0
    %1322 = vmatpush1.msra.mxu0 0.0
    %1323 = vmatprep.subr.mxu0 0.0
    %1324 = vmatpush1.msra.mxu0 0.0
    %1325 = vmatprep.mubr.f32.mxu0 0.0
    %1326 = vmatmul.mubr.f32.gmra.mrb[0].mxu0 %v1257
    %v1327 = vpop.f32.mrb[0].mxu0
    %v1328 = vadd.f32 0.0, %v1327
    %v1329 = vpop.f32.mrb[0].mxu0
    %v1330 = vadd.f32 0.0, %v1329
    %1331 = vdwg.mxu0
    %1332 = vmatprep.subr.mxu0 %v43
    %1333 = vmatpush1.msra.mxu0 %v42
    %1334 = vmatprep.subr.mxu0 %v47
    %1335 = vmatpush1.msra.mxu0 %v46
    %1336 = vmatprep.subr.mxu0 %v51
    %1337 = vmatpush1.msra.mxu0 %v50
    %1338 = vmatprep.subr.mxu0 %v55
    %1339 = vmatpush1.msra.mxu0 %v54
    %1340 = vmatprep.subr.mxu0 %v59
    %1341 = vmatpush1.msra.mxu0 %v58
    %1342 = vmatprep.subr.mxu0 %v63
    %1343 = vmatpush1.msra.mxu0 %v62
    %1344 = vmatprep.subr.mxu0 %v67
    %1345 = vmatpush1.msra.mxu0 %v66
    %1346 = vmatprep.subr.mxu0 %v71
    %1347 = vmatpush1.msra.mxu0 %v70
    %1348 = vmatprep.subr.mxu0 %v75
    %1349 = vmatpush1.msra.mxu0 %v74
    %1350 = vmatprep.subr.mxu0 %v79
    %1351 = vmatpush1.msra.mxu0 %v78
    %1352 = vmatprep.subr.mxu0 %v83
    %1353 = vmatpush1.msra.mxu0 %v82
    %1354 = vmatprep.subr.mxu0 %v87
    %1355 = vmatpush1.msra.mxu0 %v86
    %1356 = vmatprep.subr.mxu0 %v91
    %1357 = vmatpush1.msra.mxu0 %v90
    %1358 = vmatprep.subr.mxu0 %v95
    %1359 = vmatpush1.msra.mxu0 %v94
    %1360 = vmatprep.subr.mxu0 %v99
    %1361 = vmatpush1.msra.mxu0 %v98
    %1362 = vmatprep.subr.mxu0 %v103
    %1363 = vmatpush1.msra.mxu0 %v102
    %1364 = vmatprep.subr.mxu0 0.0
    %1365 = vmatpush1.msra.mxu0 0.0
    %1366 = vmatprep.subr.mxu0 0.0
    %1367 = vmatpush1.msra.mxu0 0.0
    %1368 = vmatprep.subr.mxu0 0.0
    %1369 = vmatpush1.msra.mxu0 0.0
    %1370 = vmatprep.subr.mxu0 0.0
    %1371 = vmatpush1.msra.mxu0 0.0
    %1372 = vmatprep.subr.mxu0 0.0
    %1373 = vmatpush1.msra.mxu0 0.0
    %1374 = vmatprep.subr.mxu0 0.0
    %1375 = vmatpush1.msra.mxu0 0.0
    %1376 = vmatprep.subr.mxu0 0.0
    %1377 = vmatpush1.msra.mxu0 0.0
    %1378 = vmatprep.subr.mxu0 0.0
    %1379 = vmatpush1.msra.mxu0 0.0
    %1380 = vmatprep.subr.mxu0 0.0
    %1381 = vmatpush1.msra.mxu0 0.0
    %1382 = vmatprep.subr.mxu0 0.0
    %1383 = vmatpush1.msra.mxu0 0.0
    %1384 = vmatprep.subr.mxu0 0.0
    %1385 = vmatpush1.msra.mxu0 0.0
    %1386 = vmatprep.subr.mxu0 0.0
    %1387 = vmatpush1.msra.mxu0 0.0
    %1388 = vmatprep.subr.mxu0 0.0
    %1389 = vmatpush1.msra.mxu0 0.0
    %1390 = vmatprep.subr.mxu0 0.0
    %1391 = vmatpush1.msra.mxu0 0.0
    %1392 = vmatprep.subr.mxu0 0.0
    %1393 = vmatpush1.msra.mxu0 0.0
    %1394 = vmatprep.subr.mxu0 0.0
    %1395 = vmatpush1.msra.mxu0 0.0
    %1396 = vmatprep.mubr.f32.mxu0 0.0
    %1397 = vmatmul.mubr.f32.gmra.mrb[0].mxu0 %v1257
    %v1398 = vpop.f32.mrb[0].mxu0
    %v1399 = vadd.f32 0.0, %v1398
    %v1400 = vpop.f32.mrb[0].mxu0
    %v1401 = vadd.f32 0.0, %v1400
    %1402 = vdwg.mxu0
    %v1403 = vadd.f32 %v267, %v1328
    %v1404 = vadd.f32 %v269, %v1330
    %v1405 = vadd.f32 %v380, %v1399
    %v1406 = vadd.f32 %v382, %v1401
    %v1407 = vxor.u32 %v1403, 2147483648
    %v1408 = vxor.u32 %v1404, 2147483648
    %v1409 = vxor.u32 %v1405, 2147483648
    %v1410 = vmul.f32 %v1407, 1.442695
    %v1411 = vpow.pop %v1410
    %v1412 = vmul.f32 %v1408, 1.442695
    %v1413 = vpow.pop %v1412
    %v1414 = vmul.f32 %v1409, 1.442695
    %v1415 = vpow.pop %v1414
    %v1416 = vadd.f32 %v1411, 1.0
    %v1417 = vadd.f32 %v1413, 1.0
    %v1418 = vadd.f32 %v1415, 1.0
    %v1419 = vrcp.pop %v1416
    %v1420 = vmul.f32 1.0, %v1419
    %v1421 = vrcp.pop %v1417
    %v1422 = vmul.f32 1.0, %v1421
    %v1423 = vrcp.pop %v1418
    %v1424 = vmul.f32 1.0, %v1423
    %v1425 = vtanh.pop %v1406
    %v1426 = vmul.f32 %v1422, %v1255
    %v1427 = vmul.f32 %v1420, %v1425
    %v1428 = vadd.f32 %v1426, %v1427
    %v1429 = vtanh.pop %v1428
    %v1430 = vmul.f32 %v1424, %v1429
    %v1431 = vmul.f32 %v1430, %v109
    %1432 = vadd.xlane.f32.xlu0 %v1431
    %v1433 = vpop.xlane.xlu0 %1432
    %1434 = vmatprep.subr.mxu0 %v41
    %1435 = vmatpush1.msra.mxu0 %v40
    %1436 = vmatprep.subr.mxu0 %v45
    %1437 = vmatpush1.msra.mxu0 %v44
    %1438 = vmatprep.subr.mxu0 %v49
    %1439 = vmatpush1.msra.mxu0 %v48
    %1440 = vmatprep.subr.mxu0 %v53
    %1441 = vmatpush1.msra.mxu0 %v52
    %1442 = vmatprep.subr.mxu0 %v57
    %1443 = vmatpush1.msra.mxu0 %v56
    %1444 = vmatprep.subr.mxu0 %v61
    %1445 = vmatpush1.msra.mxu0 %v60
    %1446 = vmatprep.subr.mxu0 %v65
    %1447 = vmatpush1.msra.mxu0 %v64
    %1448 = vmatprep.subr.mxu0 %v69
    %1449 = vmatpush1.msra.mxu0 %v68
    %1450 = vmatprep.subr.mxu0 %v73
    %1451 = vmatpush1.msra.mxu0 %v72
    %1452 = vmatprep.subr.mxu0 %v77
    %1453 = vmatpush1.msra.mxu0 %v76
    %1454 = vmatprep.subr.mxu0 %v81
    %1455 = vmatpush1.msra.mxu0 %v80
    %1456 = vmatprep.subr.mxu0 %v85
    %1457 = vmatpush1.msra.mxu0 %v84
    %1458 = vmatprep.subr.mxu0 %v89
    %1459 = vmatpush1.msra.mxu0 %v88
    %1460 = vmatprep.subr.mxu0 %v93
    %1461 = vmatpush1.msra.mxu0 %v92
    %1462 = vmatprep.subr.mxu0 %v97
    %1463 = vmatpush1.msra.mxu0 %v96
    %1464 = vmatprep.subr.mxu0 %v101
    %1465 = vmatpush1.msra.mxu0 %v100
    %1466 = vmatprep.subr.mxu0 0.0
    %1467 = vmatpush1.msra.mxu0 0.0
    %1468 = vmatprep.subr.mxu0 0.0
    %1469 = vmatpush1.msra.mxu0 0.0
    %1470 = vmatprep.subr.mxu0 0.0
    %1471 = vmatpush1.msra.mxu0 0.0
    %1472 = vmatprep.subr.mxu0 0.0
    %1473 = vmatpush1.msra.mxu0 0.0
    %1474 = vmatprep.subr.mxu0 0.0
    %1475 = vmatpush1.msra.mxu0 0.0
    %1476 = vmatprep.subr.mxu0 0.0
    %1477 = vmatpush1.msra.mxu0 0.0
    %1478 = vmatprep.subr.mxu0 0.0
    %1479 = vmatpush1.msra.mxu0 0.0
    %1480 = vmatprep.subr.mxu0 0.0
    %1481 = vmatpush1.msra.mxu0 0.0
    %1482 = vmatprep.subr.mxu0 0.0
    %1483 = vmatpush1.msra.mxu0 0.0
    %1484 = vmatprep.subr.mxu0 0.0
    %1485 = vmatpush1.msra.mxu0 0.0
    %1486 = vmatprep.subr.mxu0 0.0
    %1487 = vmatpush1.msra.mxu0 0.0
    %1488 = vmatprep.subr.mxu0 0.0
    %1489 = vmatpush1.msra.mxu0 0.0
    %1490 = vmatprep.subr.mxu0 0.0
    %1491 = vmatpush1.msra.mxu0 0.0
    %1492 = vmatprep.subr.mxu0 0.0
    %1493 = vmatpush1.msra.mxu0 0.0
    %1494 = vmatprep.subr.mxu0 0.0
    %1495 = vmatpush1.msra.mxu0 0.0
    %1496 = vmatprep.subr.mxu0 0.0
    %1497 = vmatpush1.msra.mxu0 0.0
    %1498 = vmatprep.mubr.f32.mxu0 0.0
    %1499 = vmatmul.mubr.f32.gmra.mrb[0].mxu0 %v1430
    %v1500 = vpop.f32.mrb[0].mxu0
    %v1501 = vadd.f32 0.0, %v1500
    %v1502 = vpop.f32.mrb[0].mxu0
    %v1503 = vadd.f32 0.0, %v1502
    %1504 = vdwg.mxu0
    %1505 = vmatprep.subr.mxu0 %v43
    %1506 = vmatpush1.msra.mxu0 %v42
    %1507 = vmatprep.subr.mxu0 %v47
    %1508 = vmatpush1.msra.mxu0 %v46
    %1509 = vmatprep.subr.mxu0 %v51
    %1510 = vmatpush1.msra.mxu0 %v50
    %1511 = vmatprep.subr.mxu0 %v55
    %1512 = vmatpush1.msra.mxu0 %v54
    %1513 = vmatprep.subr.mxu0 %v59
    %1514 = vmatpush1.msra.mxu0 %v58
    %1515 = vmatprep.subr.mxu0 %v63
    %1516 = vmatpush1.msra.mxu0 %v62
    %1517 = vmatprep.subr.mxu0 %v67
    %1518 = vmatpush1.msra.mxu0 %v66
    %1519 = vmatprep.subr.mxu0 %v71
    %1520 = vmatpush1.msra.mxu0 %v70
    %1521 = vmatprep.subr.mxu0 %v75
    %1522 = vmatpush1.msra.mxu0 %v74
    %1523 = vmatprep.subr.mxu0 %v79
    %1524 = vmatpush1.msra.mxu0 %v78
    %1525 = vmatprep.subr.mxu0 %v83
    %1526 = vmatpush1.msra.mxu0 %v82
    %1527 = vmatprep.subr.mxu0 %v87
    %1528 = vmatpush1.msra.mxu0 %v86
    %1529 = vmatprep.subr.mxu0 %v91
    %1530 = vmatpush1.msra.mxu0 %v90
    %1531 = vmatprep.subr.mxu0 %v95
    %1532 = vmatpush1.msra.mxu0 %v94
    %1533 = vmatprep.subr.mxu0 %v99
    %1534 = vmatpush1.msra.mxu0 %v98
    %1535 = vmatprep.subr.mxu0 %v103
    %1536 = vmatpush1.msra.mxu0 %v102
    %1537 = vmatprep.subr.mxu0 0.0
    %1538 = vmatpush1.msra.mxu0 0.0
    %1539 = vmatprep.subr.mxu0 0.0
    %1540 = vmatpush1.msra.mxu0 0.0
    %1541 = vmatprep.subr.mxu0 0.0
    %1542 = vmatpush1.msra.mxu0 0.0
    %1543 = vmatprep.subr.mxu0 0.0
    %1544 = vmatpush1.msra.mxu0 0.0
    %1545 = vmatprep.subr.mxu0 0.0
    %1546 = vmatpush1.msra.mxu0 0.0
    %1547 = vmatprep.subr.mxu0 0.0
    %1548 = vmatpush1.msra.mxu0 0.0
    %1549 = vmatprep.subr.mxu0 0.0
    %1550 = vmatpush1.msra.mxu0 0.0
    %1551 = vmatprep.subr.mxu0 0.0
    %1552 = vmatpush1.msra.mxu0 0.0
    %1553 = vmatprep.subr.mxu0 0.0
    %1554 = vmatpush1.msra.mxu0 0.0
    %1555 = vmatprep.subr.mxu0 0.0
    %1556 = vmatpush1.msra.mxu0 0.0
    %1557 = vmatprep.subr.mxu0 0.0
    %1558 = vmatpush1.msra.mxu0 0.0
    %1559 = vmatprep.subr.mxu0 0.0
    %1560 = vmatpush1.msra.mxu0 0.0
    %1561 = vmatprep.subr.mxu0 0.0
    %1562 = vmatpush1.msra.mxu0 0.0
    %1563 = vmatprep.subr.mxu0 0.0
    %1564 = vmatpush1.msra.mxu0 0.0
    %1565 = vmatprep.subr.mxu0 0.0
    %1566 = vmatpush1.msra.mxu0 0.0
    %1567 = vmatprep.subr.mxu0 0.0
    %1568 = vmatpush1.msra.mxu0 0.0
    %1569 = vmatprep.mubr.f32.mxu0 0.0
    %1570 = vmatmul.mubr.f32.gmra.mrb[0].mxu0 %v1430
    %v1571 = vpop.f32.mrb[0].mxu0
    %v1572 = vadd.f32 0.0, %v1571
    %v1573 = vpop.f32.mrb[0].mxu0
    %v1574 = vadd.f32 0.0, %v1573
    %1575 = vdwg.mxu0
    %v1576 = vadd.f32 %v273, %v1501
    %v1577 = vadd.f32 %v275, %v1503
    %v1578 = vadd.f32 %v386, %v1572
    %v1579 = vadd.f32 %v388, %v1574
    %v1580 = vxor.u32 %v1576, 2147483648
    %v1581 = vxor.u32 %v1577, 2147483648
    %v1582 = vxor.u32 %v1578, 2147483648
    %v1583 = vmul.f32 %v1580, 1.442695
    %v1584 = vpow.pop %v1583
    %v1585 = vmul.f32 %v1581, 1.442695
    %v1586 = vpow.pop %v1585
    %v1587 = vmul.f32 %v1582, 1.442695
    %v1588 = vpow.pop %v1587
    %v1589 = vadd.f32 %v1584, 1.0
    %v1590 = vadd.f32 %v1586, 1.0
    %v1591 = vadd.f32 %v1588, 1.0
    %v1592 = vrcp.pop %v1589
    %v1593 = vmul.f32 1.0, %v1592
    %v1594 = vrcp.pop %v1590
    %v1595 = vmul.f32 1.0, %v1594
    %v1596 = vrcp.pop %v1591
    %v1597 = vmul.f32 1.0, %v1596
    %v1598 = vtanh.pop %v1579
    %v1599 = vmul.f32 %v1595, %v1428
    %v1600 = vmul.f32 %v1593, %v1598
    %v1601 = vadd.f32 %v1599, %v1600
    %v1602 = vtanh.pop %v1601
    %v1603 = vmul.f32 %v1597, %v1602
    %v1604 = vmul.f32 %v1603, %v109
    %1605 = vadd.xlane.f32.xlu0 %v1604
    %v1606 = vpop.xlane.xlu0 %1605
    %1607 = vmatprep.subr.mxu0 %v41
    %1608 = vmatpush1.msra.mxu0 %v40
    %1609 = vmatprep.subr.mxu0 %v45
    %1610 = vmatpush1.msra.mxu0 %v44
    %1611 = vmatprep.subr.mxu0 %v49
    %1612 = vmatpush1.msra.mxu0 %v48
    %1613 = vmatprep.subr.mxu0 %v53
    %1614 = vmatpush1.msra.mxu0 %v52
    %1615 = vmatprep.subr.mxu0 %v57
    %1616 = vmatpush1.msra.mxu0 %v56
    %1617 = vmatprep.subr.mxu0 %v61
    %1618 = vmatpush1.msra.mxu0 %v60
    %1619 = vmatprep.subr.mxu0 %v65
    %1620 = vmatpush1.msra.mxu0 %v64
    %1621 = vmatprep.subr.mxu0 %v69
    %1622 = vmatpush1.msra.mxu0 %v68
    %1623 = vmatprep.subr.mxu0 %v73
    %1624 = vmatpush1.msra.mxu0 %v72
    %1625 = vmatprep.subr.mxu0 %v77
    %1626 = vmatpush1.msra.mxu0 %v76
    %1627 = vmatprep.subr.mxu0 %v81
    %1628 = vmatpush1.msra.mxu0 %v80
    %1629 = vmatprep.subr.mxu0 %v85
    %1630 = vmatpush1.msra.mxu0 %v84
    %1631 = vmatprep.subr.mxu0 %v89
    %1632 = vmatpush1.msra.mxu0 %v88
    %1633 = vmatprep.subr.mxu0 %v93
    %1634 = vmatpush1.msra.mxu0 %v92
    %1635 = vmatprep.subr.mxu0 %v97
    %1636 = vmatpush1.msra.mxu0 %v96
    %1637 = vmatprep.subr.mxu0 %v101
    %1638 = vmatpush1.msra.mxu0 %v100
    %1639 = vmatprep.subr.mxu0 0.0
    %1640 = vmatpush1.msra.mxu0 0.0
    %1641 = vmatprep.subr.mxu0 0.0
    %1642 = vmatpush1.msra.mxu0 0.0
    %1643 = vmatprep.subr.mxu0 0.0
    %1644 = vmatpush1.msra.mxu0 0.0
    %1645 = vmatprep.subr.mxu0 0.0
    %1646 = vmatpush1.msra.mxu0 0.0
    %1647 = vmatprep.subr.mxu0 0.0
    %1648 = vmatpush1.msra.mxu0 0.0
    %1649 = vmatprep.subr.mxu0 0.0
    %1650 = vmatpush1.msra.mxu0 0.0
    %1651 = vmatprep.subr.mxu0 0.0
    %1652 = vmatpush1.msra.mxu0 0.0
    %1653 = vmatprep.subr.mxu0 0.0
    %1654 = vmatpush1.msra.mxu0 0.0
    %1655 = vmatprep.subr.mxu0 0.0
    %1656 = vmatpush1.msra.mxu0 0.0
    %1657 = vmatprep.subr.mxu0 0.0
    %1658 = vmatpush1.msra.mxu0 0.0
    %1659 = vmatprep.subr.mxu0 0.0
    %1660 = vmatpush1.msra.mxu0 0.0
    %1661 = vmatprep.subr.mxu0 0.0
    %1662 = vmatpush1.msra.mxu0 0.0
    %1663 = vmatprep.subr.mxu0 0.0
    %1664 = vmatpush1.msra.mxu0 0.0
    %1665 = vmatprep.subr.mxu0 0.0
    %1666 = vmatpush1.msra.mxu0 0.0
    %1667 = vmatprep.subr.mxu0 0.0
    %1668 = vmatpush1.msra.mxu0 0.0
    %1669 = vmatprep.subr.mxu0 0.0
    %1670 = vmatpush1.msra.mxu0 0.0
    %1671 = vmatprep.mubr.f32.mxu0 0.0
    %1672 = vmatmul.mubr.f32.gmra.mrb[0].mxu0 %v1603
    %v1673 = vpop.f32.mrb[0].mxu0
    %v1674 = vadd.f32 0.0, %v1673
    %v1675 = vpop.f32.mrb[0].mxu0
    %v1676 = vadd.f32 0.0, %v1675
    %1677 = vdwg.mxu0
    %1678 = vmatprep.subr.mxu0 %v43
    %1679 = vmatpush1.msra.mxu0 %v42
    %1680 = vmatprep.subr.mxu0 %v47
    %1681 = vmatpush1.msra.mxu0 %v46
    %1682 = vmatprep.subr.mxu0 %v51
    %1683 = vmatpush1.msra.mxu0 %v50
    %1684 = vmatprep.subr.mxu0 %v55
    %1685 = vmatpush1.msra.mxu0 %v54
    %1686 = vmatprep.subr.mxu0 %v59
    %1687 = vmatpush1.msra.mxu0 %v58
    %1688 = vmatprep.subr.mxu0 %v63
    %1689 = vmatpush1.msra.mxu0 %v62
    %1690 = vmatprep.subr.mxu0 %v67
    %1691 = vmatpush1.msra.mxu0 %v66
    %1692 = vmatprep.subr.mxu0 %v71
    %1693 = vmatpush1.msra.mxu0 %v70
    %1694 = vmatprep.subr.mxu0 %v75
    %1695 = vmatpush1.msra.mxu0 %v74
    %1696 = vmatprep.subr.mxu0 %v79
    %1697 = vmatpush1.msra.mxu0 %v78
    %1698 = vmatprep.subr.mxu0 %v83
    %1699 = vmatpush1.msra.mxu0 %v82
    %1700 = vmatprep.subr.mxu0 %v87
    %1701 = vmatpush1.msra.mxu0 %v86
    %1702 = vmatprep.subr.mxu0 %v91
    %1703 = vmatpush1.msra.mxu0 %v90
    %1704 = vmatprep.subr.mxu0 %v95
    %1705 = vmatpush1.msra.mxu0 %v94
    %1706 = vmatprep.subr.mxu0 %v99
    %1707 = vmatpush1.msra.mxu0 %v98
    %1708 = vmatprep.subr.mxu0 %v103
    %1709 = vmatpush1.msra.mxu0 %v102
    %1710 = vmatprep.subr.mxu0 0.0
    %1711 = vmatpush1.msra.mxu0 0.0
    %1712 = vmatprep.subr.mxu0 0.0
    %1713 = vmatpush1.msra.mxu0 0.0
    %1714 = vmatprep.subr.mxu0 0.0
    %1715 = vmatpush1.msra.mxu0 0.0
    %1716 = vmatprep.subr.mxu0 0.0
    %1717 = vmatpush1.msra.mxu0 0.0
    %1718 = vmatprep.subr.mxu0 0.0
    %1719 = vmatpush1.msra.mxu0 0.0
    %1720 = vmatprep.subr.mxu0 0.0
    %1721 = vmatpush1.msra.mxu0 0.0
    %1722 = vmatprep.subr.mxu0 0.0
    %1723 = vmatpush1.msra.mxu0 0.0
    %1724 = vmatprep.subr.mxu0 0.0
    %1725 = vmatpush1.msra.mxu0 0.0
    %1726 = vmatprep.subr.mxu0 0.0
    %1727 = vmatpush1.msra.mxu0 0.0
    %1728 = vmatprep.subr.mxu0 0.0
    %1729 = vmatpush1.msra.mxu0 0.0
    %1730 = vmatprep.subr.mxu0 0.0
    %1731 = vmatpush1.msra.mxu0 0.0
    %1732 = vmatprep.subr.mxu0 0.0
    %1733 = vmatpush1.msra.mxu0 0.0
    %1734 = vmatprep.subr.mxu0 0.0
    %1735 = vmatpush1.msra.mxu0 0.0
    %1736 = vmatprep.subr.mxu0 0.0
    %1737 = vmatpush1.msra.mxu0 0.0
    %1738 = vmatprep.subr.mxu0 0.0
    %1739 = vmatpush1.msra.mxu0 0.0
    %1740 = vmatprep.subr.mxu0 0.0
    %1741 = vmatpush1.msra.mxu0 0.0
    %1742 = vmatprep.mubr.f32.mxu0 0.0
    %1743 = vmatmul.mubr.f32.gmra.mrb[0].mxu0 %v1603
    %v1744 = vpop.f32.mrb[0].mxu0
    %v1745 = vadd.f32 0.0, %v1744
    %v1746 = vpop.f32.mrb[0].mxu0
    %v1747 = vadd.f32 0.0, %v1746
    %1748 = vdwg.mxu0
    %v1749 = vadd.f32 %v279, %v1674
    %v1750 = vadd.f32 %v281, %v1676
    %v1751 = vadd.f32 %v392, %v1745
    %v1752 = vadd.f32 %v394, %v1747
    %v1753 = vxor.u32 %v1749, 2147483648
    %v1754 = vxor.u32 %v1750, 2147483648
    %v1755 = vxor.u32 %v1751, 2147483648
    %v1756 = vmul.f32 %v1753, 1.442695
    %v1757 = vpow.pop %v1756
    %v1758 = vmul.f32 %v1754, 1.442695
    %v1759 = vpow.pop %v1758
    %v1760 = vmul.f32 %v1755, 1.442695
    %v1761 = vpow.pop %v1760
    %v1762 = vadd.f32 %v1757, 1.0
    %v1763 = vadd.f32 %v1759, 1.0
    %v1764 = vadd.f32 %v1761, 1.0
    %v1765 = vrcp.pop %v1762
    %v1766 = vmul.f32 1.0, %v1765
    %v1767 = vrcp.pop %v1763
    %v1768 = vmul.f32 1.0, %v1767
    %v1769 = vrcp.pop %v1764
    %v1770 = vmul.f32 1.0, %v1769
    %v1771 = vtanh.pop %v1752
    %v1772 = vmul.f32 %v1768, %v1601
    %v1773 = vmul.f32 %v1766, %v1771
    %v1774 = vadd.f32 %v1772, %v1773
    %v1775 = vtanh.pop %v1774
    %v1776 = vmul.f32 %v1770, %v1775
    %v1777 = vmul.f32 %v1776, %v109
    %1778 = vadd.xlane.f32.xlu0 %v1777
    %v1779 = vpop.xlane.xlu0 %1778
    %vm1780 = vcmask 7168
    %v1781 = vsel %vm1780, %v568, %v741
    %vm1782 = vcmask 15360
    %v1783 = vsel %vm1782, %v1781, %v914
    %vm1784 = vcmask 23552
    %v1785 = vsel %vm1784, %v1783, %v1087
    %vm1786 = vcmask 31744
    %v1787 = vsel %vm1786, %v1785, %v1260
    %vm1788 = vcmask 39936
    %v1789 = vsel %vm1788, %v1787, %v1433
    %vm1790 = vcmask 48128
    %v1791 = vsel %vm1790, %v1789, %v1606
    %vm1792 = vcmask 56320
    %v1793 = vsel %vm1792, %v1791, %v1779
    %v1794 = vld [vmem:[#allocation2] sm:$0x1]
    %v1796 = vlaneseq
    %v1797 = vshrl.u32 %v1796, 7
    %v1798 = vsub.s32 0, %v1797
    %v1799 = vrot.slane %v1794, %v1798
    %1800 = vset.pattern.permute.xlu0 0
    %1801 = vperm.xlu0 %1800, %v1799
    %v1802 = vpop.permute.xlu0 %1801
    %v1804 = vadd.f32 %v1793, %v1802
    %1805 = vst.msk [vmem:[#allocation6] sm:$0xff] %vm145, %v1804
    // Predicated region
    $region30: #{tpu_custom_call.1} parent=1 // pred_check
      _
    $region31: #{tpu_custom_call.1} parent=1 // pred_check_branch
      %1807 = sbr.rel (0) target = $region33
    $region32: #{tpu_custom_call.1} parent=1 // pred_region
      %s1809 = ssub.s32 128, 128
      %1810 = vsyncadd [#allocation5], %s1809
      %s1812 = sshll.u32 [#allocation6], 4
      %s1813 = int_to_ptr.vmem [resolvable:$true] %s1812
      %1815 = dma.vmem_to_hbm [thread:$0]  %s1813, 128, %s6, [#allocation5]
    $region33: #{tpu_custom_call.1} parent=1 // pred_fallthru
      _
    // Predicated region
    $region34: #{tpu_custom_call.1} parent=1 // pred_check
      _
    $region35: #{tpu_custom_call.1} parent=1 // pred_check_branch
      %1817 = sbr.rel (0) target = $region37
    $region36: #{tpu_custom_call.1} parent=1 // pred_region
      %1818 = dma.done [#allocation5], 128
    $region37: #{tpu_custom_call.1} parent=1 // pred_fallthru
      _
    %1819 = vsyncpa [#allocation4], 1
    %1820 = vsyncpa [#allocation5], 1

</llo_original>
